<compile_context>
chip_gen: v7x
topology: tpu7x:2x2x1
jax: 0.10.0
libtpu: 0.0.40
codegen_flags: <defaults>
</compile_context>

<pallas_src>
import functools
import math

import jax
import jax.numpy as jnp
from jax.experimental import pallas as pl
from jax.experimental.pallas import tpu as pltpu

LANES = 128  # lane-padded width of the fc/softmax output slab


# ----------------------------------------------------------------------------
# Fused Pallas kernel: LSTM (last hidden) + Linear + Softmax
# ----------------------------------------------------------------------------
def actor_fused_kernel(x_ref, wih_ref, whh_ref, b_ref, fcw_ref, fcb_ref,
                       out_ref, *, T, N, B, A, H):
    """Fused Actor forward.

    x_ref:   (T*N, I)    time-major inputs, row t*N + n == (time t, sequence n)
    wih_ref: (I, 4H)     pre-transposed weight_ih_l0 (gate order i, f, g, o)
    whh_ref: (H, 4H)     pre-transposed weight_hh_l0
    b_ref:   (1, 4H)     b_ih + b_hh
    fcw_ref: (A*H, 128)  pre-transposed fc weight, zero-padded in lanes [A:]
    fcb_ref: (1, 128)    fc bias, -1e30 in padded lanes [A:]
    out_ref: (B, 128)    softmax probs in lanes [:A], zeros in lanes [A:]
    """
    G = 4 * H

    # ---- Hoisted input projection: ONE (T*N, I) x (I, 4H) matmul + bias. ----
    gates_in = (jnp.dot(x_ref[...], wih_ref[...],
                        preferred_element_type=jnp.float32) + b_ref[...])
    whh = whh_ref[...]                                            # (H, 4H)

    # Hoisted lane mask: tanh on the g-gate lanes, sigmoid on i/f/o lanes.
    lane = jax.lax.broadcasted_iota(jnp.int32, (N, G), 1)
    is_g = (lane >= 2 * H) & (lane < 3 * H)

    h = jnp.zeros((N, H), jnp.float32)
    c = jnp.zeros((N, H), jnp.float32)

    # ---- Fully unrolled recurrence (T is static & tiny). ----
    for t in range(T):
        if t == 0:
            gates = gates_in[0:N, :]                              # h0 == 0
        else:
            gates = gates_in[t * N:(t + 1) * N, :] + jnp.dot(
                h, whh, preferred_element_type=jnp.float32)       # (N, 4H)
        act = jnp.where(is_g, jnp.tanh(gates), jax.nn.sigmoid(gates))
        i_g = act[:, 0:H]
        f_g = act[:, H:2 * H]
        g_g = act[:, 2 * H:3 * H]
        o_g = act[:, 3 * H:4 * H]
        c = f_g * c + i_g * g_g
        h = o_g * jnp.tanh(c)

    # ---- Head: logits[b] = fc_b + sum_a h[b*A + a] @ W_fc^T[a*H:(a+1)*H]. ----
    # Row-gather h with tiny 0/1 selection matmuls instead of an in-kernel
    # (N, H) -> (B, A*H) reshape (keeps everything on the plain MXU path).
    row_ids = jax.lax.broadcasted_iota(jnp.int32, (B, N), 1)
    b_ids = jax.lax.broadcasted_iota(jnp.int32, (B, N), 0)
    logits = jnp.zeros((B, LANES), jnp.float32) + fcb_ref[...]
    for a in range(A):
        sel = jnp.where(row_ids == b_ids * A + a, 1.0, 0.0)       # (B, N)
        h_a = jnp.dot(sel, h, preferred_element_type=jnp.float32)  # (B, H)
        logits = logits + jnp.dot(h_a, fcw_ref[a * H:(a + 1) * H, :],
                                  preferred_element_type=jnp.float32)

    # Softmax over lanes; padded lanes carry a -1e30 bias so exp == 0 there.
    m = jnp.max(logits, axis=1, keepdims=True)
    e = jnp.exp(logits - m)
    out_ref[...] = e / jnp.sum(e, axis=1, keepdims=True)


# ----------------------------------------------------------------------------
# Wrapper
# ----------------------------------------------------------------------------
def actor_forward(state, params):
    """state: (B, A, T, I) float32 -> softmax policy probs (B, A)."""
    B, A, T, I = state.shape
    H = params['w_hh_t'].shape[0]
    N = B * A

    x = state.reshape(N, T, I)                               # x.view(-1, T, I)
    x_tm = jnp.transpose(x, (1, 0, 2)).reshape(T * N, I)     # time-major, flat

    kernel = functools.partial(actor_fused_kernel, T=T, N=N, B=B, A=A, H=H)
    vmem = pl.BlockSpec(memory_space=pltpu.MemorySpace.VMEM)
    probs_pad = pl.pallas_call(
        kernel,
        out_shape=jax.ShapeDtypeStruct((B, LANES), jnp.float32),
        in_specs=[vmem] * 6,
        out_specs=vmem,
    )(x_tm, params['w_ih_t'], params['w_hh_t'], params['b'],
      params['fc_w_t_pad'], params['fc_b_pad'])
    return probs_pad[:, :A]


# ----------------------------------------------------------------------------
# Parameters (deterministic synthetic init, PyTorch-style uniform)
# ----------------------------------------------------------------------------
def init_params(key, input_size, hidden_size, action_size):
    H, I, A = hidden_size, input_size, action_size
    k_lstm = 1.0 / math.sqrt(H)
    k_fc = 1.0 / math.sqrt(H * A)
    keys = jax.random.split(key, 6)
    u = lambda kk, shape, k: jax.random.uniform(kk, shape, jnp.float32, -k, k)

    w_ih = u(keys[0], (4 * H, I), k_lstm)        # PyTorch weight_ih_l0
    w_hh = u(keys[1], (4 * H, H), k_lstm)        # PyTorch weight_hh_l0
    b = u(keys[2], (4 * H,), k_lstm) + u(keys[3], (4 * H,), k_lstm)  # b_ih+b_hh
    fc_w = u(keys[4], (A, H * A), k_fc)          # PyTorch fc.weight
    fc_b = u(keys[5], (A,), k_fc)                # PyTorch fc.bias

    # Pre-transposed / lane-padded layouts consumed by the kernel.
    fc_w_t_pad = jnp.zeros((H * A, LANES), jnp.float32).at[:, :A].set(fc_w.T)
    fc_b_pad = jnp.full((LANES,), -1e30, jnp.float32).at[:A].set(fc_b)

    return {
        'w_ih_t': jnp.asarray(w_ih.T),           # (I, 4H)
        'w_hh_t': jnp.asarray(w_hh.T),           # (H, 4H)
        'b': b.reshape(1, 4 * H),                # (1, 4H)
        'fc_w_t_pad': fc_w_t_pad,                # (A*H, 128)
        'fc_b_pad': fc_b_pad.reshape(1, LANES),  # (1, 128)
        # nn.Parameter(torch.zeros(action_size)); defined by the module but
        # unused in Actor.forward — kept only for parameter parity.
        'policy_log_std': jnp.zeros((A,), jnp.float32),
        # Original layouts, kept only for the pure-JAX reference check below.
        '_w_ih': w_ih, '_w_hh': w_hh, '_b': b, '_fc_w': fc_w, '_fc_b': fc_b,
    }


# ----------------------------------------------------------------------------
# Pure-JAX reference (for correctness check)
# ----------------------------------------------------------------------------
def actor_forward_ref(state, params):
    B, A, T, I = state.shape
    H = params['_w_hh'].shape[1]
    N = B * A
    x = state.reshape(N, T, I)
    w_ih_t, w_hh_t, b = params['_w_ih'].T, params['_w_hh'].T, params['_b']

    def step(carry, x_t):
        h, c = carry
        gates = x_t @ w_ih_t + h @ w_hh_t + b
        i = jax.nn.sigmoid(gates[:, :H])
        f = jax.nn.sigmoid(gates[:, H:2 * H])
        g = jnp.tanh(gates[:, 2 * H:3 * H])
        o = jax.nn.sigmoid(gates[:, 3 * H:])
        c = f * c + i * g
        h = o * jnp.tanh(c)
        return (h, c), None

    h0 = jnp.zeros((N, H), jnp.float32)
    c0 = jnp.zeros((N, H), jnp.float32)
    (h, _), _ = jax.lax.scan(step, (h0, c0), jnp.transpose(x, (1, 0, 2)))
    logits = h.reshape(B, A * H) @ params['_fc_w'].T + params['_fc_b']
    return jax.nn.softmax(logits, axis=1)


# ----------------------------------------------------------------------------
# Main
# ----------------------------------------------------------------------------
if __name__ == "__main__":
    input_size = 8
    hidden_size = 32
    action_size = 4
    seq_len = 8
    batch = 2

    root = jax.random.PRNGKey(0)
    k_param, k_state = jax.random.split(root)

    params = init_params(k_param, input_size, hidden_size, action_size)
    state = jax.random.normal(
        k_state, (batch, action_size, seq_len, input_size), dtype=jnp.float32)

    probs = jax.jit(actor_forward)(state, params)
    jax.block_until_ready(probs)

    assert probs.shape == (batch, action_size)
    assert bool(jnp.all(jnp.isfinite(probs)))
    assert bool(jnp.allclose(jnp.sum(probs, axis=1), 1.0, atol=1e-5))

    ref = actor_forward_ref(state, params)
    assert bool(jnp.allclose(probs, ref, atol=2e-3, rtol=2e-3))

    print("KERNEL_OK")
</pallas_src>

<mosaic_0001>
module attributes {stable_mosaic.version = 11 : i64} {
  func.func @actor_fused_kernel(%arg0: memref<64x8xf32, #tpu.memory_space<vmem>>, %arg1: memref<8x128xf32, #tpu.memory_space<vmem>>, %arg2: memref<32x128xf32, #tpu.memory_space<vmem>>, %arg3: memref<1x128xf32, #tpu.memory_space<vmem>>, %arg4: memref<128x128xf32, #tpu.memory_space<vmem>>, %arg5: memref<1x128xf32, #tpu.memory_space<vmem>>, %arg6: memref<2x128xf32, #tpu.memory_space<vmem>>) attributes {dimension_semantics = [], scalar_prefetch = 0 : i64, scratch_operands = 0 : i64, tpu.core_type = #tpu.core_type<tc>} {
    %c0 = arith.constant 0 : index
    %c0_0 = arith.constant 0 : index
    %0 = vector.load %arg0[%c0, %c0_0] : memref<64x8xf32, #tpu.memory_space<vmem>>, vector<64x8xf32>
    %c0_1 = arith.constant 0 : index
    %c0_2 = arith.constant 0 : index
    %1 = vector.load %arg1[%c0_1, %c0_2] : memref<8x128xf32, #tpu.memory_space<vmem>>, vector<8x128xf32>
    %cst = arith.constant dense<0.000000e+00> : vector<64x128xf32>
    %2 = tpu.matmul %0, %1, %cst {dimension_numbers = #tpu.dot_dimension_numbers<[1], [0], [0], [1], [0, 0, 1, 1], [], []>} : vector<64x8xf32>, vector<8x128xf32>, vector<64x128xf32> -> vector<64x128xf32>
    %c0_3 = arith.constant 0 : index
    %c0_4 = arith.constant 0 : index
    %3 = vector.load %arg3[%c0_3, %c0_4] : memref<1x128xf32, #tpu.memory_space<vmem>>, vector<1x128xf32>
    %4 = vector.broadcast %3 : vector<1x128xf32> to vector<64x128xf32>
    %5 = arith.addf %2, %4 : vector<64x128xf32>
    %c0_5 = arith.constant 0 : index
    %c0_6 = arith.constant 0 : index
    %6 = vector.load %arg2[%c0_5, %c0_6] : memref<32x128xf32, #tpu.memory_space<vmem>>, vector<32x128xf32>
    %7 = tpu.iota {dimensions = array<i32: 1>} : vector<8x128xi32>
    %c64_i32 = arith.constant 64 : i32
    %8 = vector.broadcast %c64_i32 : i32 to vector<8x128xi32>
    %9 = arith.cmpi sge, %7, %8 : vector<8x128xi32>
    %c96_i32 = arith.constant 96 : i32
    %10 = vector.broadcast %c96_i32 : i32 to vector<8x128xi32>
    %11 = arith.cmpi slt, %7, %10 : vector<8x128xi32>
    %12 = arith.andi %9, %11 : vector<8x128xi1>
    %cst_7 = arith.constant 0.000000e+00 : f32
    %13 = vector.broadcast %cst_7 : f32 to vector<8x32xf32>
    %14 = vector.extract_strided_slice %5 {offsets = [0, 0], sizes = [8, 128], strides = [1, 1]} : vector<64x128xf32> to vector<8x128xf32>
    %15 = math.tanh %14 : vector<8x128xf32>
    %16 = arith.negf %14 : vector<8x128xf32>
    %17 = math.exp %16 : vector<8x128xf32>
    %cst_8 = arith.constant 1.000000e+00 : f32
    %18 = vector.broadcast %cst_8 : f32 to vector<8x128xf32>
    %19 = arith.addf %18, %17 : vector<8x128xf32>
    %20 = arith.divf %18, %19 : vector<8x128xf32>
    %21 = arith.select %12, %15, %20 : vector<8x128xi1>, vector<8x128xf32>
    %22 = vector.extract_strided_slice %21 {offsets = [0, 0], sizes = [8, 32], strides = [1, 1]} : vector<8x128xf32> to vector<8x32xf32>
    %23 = vector.extract_strided_slice %21 {offsets = [0, 32], sizes = [8, 32], strides = [1, 1]} : vector<8x128xf32> to vector<8x32xf32>
    %24 = vector.extract_strided_slice %21 {offsets = [0, 64], sizes = [8, 32], strides = [1, 1]} : vector<8x128xf32> to vector<8x32xf32>
    %25 = vector.extract_strided_slice %21 {offsets = [0, 96], sizes = [8, 32], strides = [1, 1]} : vector<8x128xf32> to vector<8x32xf32>
    %26 = arith.mulf %23, %13 : vector<8x32xf32>
    %27 = arith.mulf %22, %24 : vector<8x32xf32>
    %28 = arith.addf %26, %27 : vector<8x32xf32>
    %29 = math.tanh %28 : vector<8x32xf32>
    %30 = arith.mulf %25, %29 : vector<8x32xf32>
    %31 = vector.extract_strided_slice %5 {offsets = [8, 0], sizes = [8, 128], strides = [1, 1]} : vector<64x128xf32> to vector<8x128xf32>
    %cst_9 = arith.constant dense<0.000000e+00> : vector<8x128xf32>
    %32 = tpu.matmul %30, %6, %cst_9 {dimension_numbers = #tpu.dot_dimension_numbers<[1], [0], [0], [1], [0, 0, 1, 1], [], []>} : vector<8x32xf32>, vector<32x128xf32>, vector<8x128xf32> -> vector<8x128xf32>
    %33 = arith.addf %31, %32 : vector<8x128xf32>
    %34 = math.tanh %33 : vector<8x128xf32>
    %35 = arith.negf %33 : vector<8x128xf32>
    %36 = math.exp %35 : vector<8x128xf32>
    %cst_10 = arith.constant 1.000000e+00 : f32
    %37 = vector.broadcast %cst_10 : f32 to vector<8x128xf32>
    %38 = arith.addf %37, %36 : vector<8x128xf32>
    %39 = arith.divf %37, %38 : vector<8x128xf32>
    %40 = arith.select %12, %34, %39 : vector<8x128xi1>, vector<8x128xf32>
    %41 = vector.extract_strided_slice %40 {offsets = [0, 0], sizes = [8, 32], strides = [1, 1]} : vector<8x128xf32> to vector<8x32xf32>
    %42 = vector.extract_strided_slice %40 {offsets = [0, 32], sizes = [8, 32], strides = [1, 1]} : vector<8x128xf32> to vector<8x32xf32>
    %43 = vector.extract_strided_slice %40 {offsets = [0, 64], sizes = [8, 32], strides = [1, 1]} : vector<8x128xf32> to vector<8x32xf32>
    %44 = vector.extract_strided_slice %40 {offsets = [0, 96], sizes = [8, 32], strides = [1, 1]} : vector<8x128xf32> to vector<8x32xf32>
    %45 = arith.mulf %42, %28 : vector<8x32xf32>
    %46 = arith.mulf %41, %43 : vector<8x32xf32>
    %47 = arith.addf %45, %46 : vector<8x32xf32>
    %48 = math.tanh %47 : vector<8x32xf32>
    %49 = arith.mulf %44, %48 : vector<8x32xf32>
    %50 = vector.extract_strided_slice %5 {offsets = [16, 0], sizes = [8, 128], strides = [1, 1]} : vector<64x128xf32> to vector<8x128xf32>
    %cst_11 = arith.constant dense<0.000000e+00> : vector<8x128xf32>
    %51 = tpu.matmul %49, %6, %cst_11 {dimension_numbers = #tpu.dot_dimension_numbers<[1], [0], [0], [1], [0, 0, 1, 1], [], []>} : vector<8x32xf32>, vector<32x128xf32>, vector<8x128xf32> -> vector<8x128xf32>
    %52 = arith.addf %50, %51 : vector<8x128xf32>
    %53 = math.tanh %52 : vector<8x128xf32>
    %54 = arith.negf %52 : vector<8x128xf32>
    %55 = math.exp %54 : vector<8x128xf32>
    %cst_12 = arith.constant 1.000000e+00 : f32
    %56 = vector.broadcast %cst_12 : f32 to vector<8x128xf32>
    %57 = arith.addf %56, %55 : vector<8x128xf32>
    %58 = arith.divf %56, %57 : vector<8x128xf32>
    %59 = arith.select %12, %53, %58 : vector<8x128xi1>, vector<8x128xf32>
    %60 = vector.extract_strided_slice %59 {offsets = [0, 0], sizes = [8, 32], strides = [1, 1]} : vector<8x128xf32> to vector<8x32xf32>
    %61 = vector.extract_strided_slice %59 {offsets = [0, 32], sizes = [8, 32], strides = [1, 1]} : vector<8x128xf32> to vector<8x32xf32>
    %62 = vector.extract_strided_slice %59 {offsets = [0, 64], sizes = [8, 32], strides = [1, 1]} : vector<8x128xf32> to vector<8x32xf32>
    %63 = vector.extract_strided_slice %59 {offsets = [0, 96], sizes = [8, 32], strides = [1, 1]} : vector<8x128xf32> to vector<8x32xf32>
    %64 = arith.mulf %61, %47 : vector<8x32xf32>
    %65 = arith.mulf %60, %62 : vector<8x32xf32>
    %66 = arith.addf %64, %65 : vector<8x32xf32>
    %67 = math.tanh %66 : vector<8x32xf32>
    %68 = arith.mulf %63, %67 : vector<8x32xf32>
    %69 = vector.extract_strided_slice %5 {offsets = [24, 0], sizes = [8, 128], strides = [1, 1]} : vector<64x128xf32> to vector<8x128xf32>
    %cst_13 = arith.constant dense<0.000000e+00> : vector<8x128xf32>
    %70 = tpu.matmul %68, %6, %cst_13 {dimension_numbers = #tpu.dot_dimension_numbers<[1], [0], [0], [1], [0, 0, 1, 1], [], []>} : vector<8x32xf32>, vector<32x128xf32>, vector<8x128xf32> -> vector<8x128xf32>
    %71 = arith.addf %69, %70 : vector<8x128xf32>
    %72 = math.tanh %71 : vector<8x128xf32>
    %73 = arith.negf %71 : vector<8x128xf32>
    %74 = math.exp %73 : vector<8x128xf32>
    %cst_14 = arith.constant 1.000000e+00 : f32
    %75 = vector.broadcast %cst_14 : f32 to vector<8x128xf32>
    %76 = arith.addf %75, %74 : vector<8x128xf32>
    %77 = arith.divf %75, %76 : vector<8x128xf32>
    %78 = arith.select %12, %72, %77 : vector<8x128xi1>, vector<8x128xf32>
    %79 = vector.extract_strided_slice %78 {offsets = [0, 0], sizes = [8, 32], strides = [1, 1]} : vector<8x128xf32> to vector<8x32xf32>
    %80 = vector.extract_strided_slice %78 {offsets = [0, 32], sizes = [8, 32], strides = [1, 1]} : vector<8x128xf32> to vector<8x32xf32>
    %81 = vector.extract_strided_slice %78 {offsets = [0, 64], sizes = [8, 32], strides = [1, 1]} : vector<8x128xf32> to vector<8x32xf32>
    %82 = vector.extract_strided_slice %78 {offsets = [0, 96], sizes = [8, 32], strides = [1, 1]} : vector<8x128xf32> to vector<8x32xf32>
    %83 = arith.mulf %80, %66 : vector<8x32xf32>
    %84 = arith.mulf %79, %81 : vector<8x32xf32>
    %85 = arith.addf %83, %84 : vector<8x32xf32>
    %86 = math.tanh %85 : vector<8x32xf32>
    %87 = arith.mulf %82, %86 : vector<8x32xf32>
    %88 = vector.extract_strided_slice %5 {offsets = [32, 0], sizes = [8, 128], strides = [1, 1]} : vector<64x128xf32> to vector<8x128xf32>
    %cst_15 = arith.constant dense<0.000000e+00> : vector<8x128xf32>
    %89 = tpu.matmul %87, %6, %cst_15 {dimension_numbers = #tpu.dot_dimension_numbers<[1], [0], [0], [1], [0, 0, 1, 1], [], []>} : vector<8x32xf32>, vector<32x128xf32>, vector<8x128xf32> -> vector<8x128xf32>
    %90 = arith.addf %88, %89 : vector<8x128xf32>
    %91 = math.tanh %90 : vector<8x128xf32>
    %92 = arith.negf %90 : vector<8x128xf32>
    %93 = math.exp %92 : vector<8x128xf32>
    %cst_16 = arith.constant 1.000000e+00 : f32
    %94 = vector.broadcast %cst_16 : f32 to vector<8x128xf32>
    %95 = arith.addf %94, %93 : vector<8x128xf32>
    %96 = arith.divf %94, %95 : vector<8x128xf32>
    %97 = arith.select %12, %91, %96 : vector<8x128xi1>, vector<8x128xf32>
    %98 = vector.extract_strided_slice %97 {offsets = [0, 0], sizes = [8, 32], strides = [1, 1]} : vector<8x128xf32> to vector<8x32xf32>
    %99 = vector.extract_strided_slice %97 {offsets = [0, 32], sizes = [8, 32], strides = [1, 1]} : vector<8x128xf32> to vector<8x32xf32>
    %100 = vector.extract_strided_slice %97 {offsets = [0, 64], sizes = [8, 32], strides = [1, 1]} : vector<8x128xf32> to vector<8x32xf32>
    %101 = vector.extract_strided_slice %97 {offsets = [0, 96], sizes = [8, 32], strides = [1, 1]} : vector<8x128xf32> to vector<8x32xf32>
    %102 = arith.mulf %99, %85 : vector<8x32xf32>
    %103 = arith.mulf %98, %100 : vector<8x32xf32>
    %104 = arith.addf %102, %103 : vector<8x32xf32>
    %105 = math.tanh %104 : vector<8x32xf32>
    %106 = arith.mulf %101, %105 : vector<8x32xf32>
    %107 = vector.extract_strided_slice %5 {offsets = [40, 0], sizes = [8, 128], strides = [1, 1]} : vector<64x128xf32> to vector<8x128xf32>
    %cst_17 = arith.constant dense<0.000000e+00> : vector<8x128xf32>
    %108 = tpu.matmul %106, %6, %cst_17 {dimension_numbers = #tpu.dot_dimension_numbers<[1], [0], [0], [1], [0, 0, 1, 1], [], []>} : vector<8x32xf32>, vector<32x128xf32>, vector<8x128xf32> -> vector<8x128xf32>
    %109 = arith.addf %107, %108 : vector<8x128xf32>
    %110 = math.tanh %109 : vector<8x128xf32>
    %111 = arith.negf %109 : vector<8x128xf32>
    %112 = math.exp %111 : vector<8x128xf32>
    %cst_18 = arith.constant 1.000000e+00 : f32
    %113 = vector.broadcast %cst_18 : f32 to vector<8x128xf32>
    %114 = arith.addf %113, %112 : vector<8x128xf32>
    %115 = arith.divf %113, %114 : vector<8x128xf32>
    %116 = arith.select %12, %110, %115 : vector<8x128xi1>, vector<8x128xf32>
    %117 = vector.extract_strided_slice %116 {offsets = [0, 0], sizes = [8, 32], strides = [1, 1]} : vector<8x128xf32> to vector<8x32xf32>
    %118 = vector.extract_strided_slice %116 {offsets = [0, 32], sizes = [8, 32], strides = [1, 1]} : vector<8x128xf32> to vector<8x32xf32>
    %119 = vector.extract_strided_slice %116 {offsets = [0, 64], sizes = [8, 32], strides = [1, 1]} : vector<8x128xf32> to vector<8x32xf32>
    %120 = vector.extract_strided_slice %116 {offsets = [0, 96], sizes = [8, 32], strides = [1, 1]} : vector<8x128xf32> to vector<8x32xf32>
    %121 = arith.mulf %118, %104 : vector<8x32xf32>
    %122 = arith.mulf %117, %119 : vector<8x32xf32>
    %123 = arith.addf %121, %122 : vector<8x32xf32>
    %124 = math.tanh %123 : vector<8x32xf32>
    %125 = arith.mulf %120, %124 : vector<8x32xf32>
    %126 = vector.extract_strided_slice %5 {offsets = [48, 0], sizes = [8, 128], strides = [1, 1]} : vector<64x128xf32> to vector<8x128xf32>
    %cst_19 = arith.constant dense<0.000000e+00> : vector<8x128xf32>
    %127 = tpu.matmul %125, %6, %cst_19 {dimension_numbers = #tpu.dot_dimension_numbers<[1], [0], [0], [1], [0, 0, 1, 1], [], []>} : vector<8x32xf32>, vector<32x128xf32>, vector<8x128xf32> -> vector<8x128xf32>
    %128 = arith.addf %126, %127 : vector<8x128xf32>
    %129 = math.tanh %128 : vector<8x128xf32>
    %130 = arith.negf %128 : vector<8x128xf32>
    %131 = math.exp %130 : vector<8x128xf32>
    %cst_20 = arith.constant 1.000000e+00 : f32
    %132 = vector.broadcast %cst_20 : f32 to vector<8x128xf32>
    %133 = arith.addf %132, %131 : vector<8x128xf32>
    %134 = arith.divf %132, %133 : vector<8x128xf32>
    %135 = arith.select %12, %129, %134 : vector<8x128xi1>, vector<8x128xf32>
    %136 = vector.extract_strided_slice %135 {offsets = [0, 0], sizes = [8, 32], strides = [1, 1]} : vector<8x128xf32> to vector<8x32xf32>
    %137 = vector.extract_strided_slice %135 {offsets = [0, 32], sizes = [8, 32], strides = [1, 1]} : vector<8x128xf32> to vector<8x32xf32>
    %138 = vector.extract_strided_slice %135 {offsets = [0, 64], sizes = [8, 32], strides = [1, 1]} : vector<8x128xf32> to vector<8x32xf32>
    %139 = vector.extract_strided_slice %135 {offsets = [0, 96], sizes = [8, 32], strides = [1, 1]} : vector<8x128xf32> to vector<8x32xf32>
    %140 = arith.mulf %137, %123 : vector<8x32xf32>
    %141 = arith.mulf %136, %138 : vector<8x32xf32>
    %142 = arith.addf %140, %141 : vector<8x32xf32>
    %143 = math.tanh %142 : vector<8x32xf32>
    %144 = arith.mulf %139, %143 : vector<8x32xf32>
    %145 = vector.extract_strided_slice %5 {offsets = [56, 0], sizes = [8, 128], strides = [1, 1]} : vector<64x128xf32> to vector<8x128xf32>
    %cst_21 = arith.constant dense<0.000000e+00> : vector<8x128xf32>
    %146 = tpu.matmul %144, %6, %cst_21 {dimension_numbers = #tpu.dot_dimension_numbers<[1], [0], [0], [1], [0, 0, 1, 1], [], []>} : vector<8x32xf32>, vector<32x128xf32>, vector<8x128xf32> -> vector<8x128xf32>
    %147 = arith.addf %145, %146 : vector<8x128xf32>
    %148 = math.tanh %147 : vector<8x128xf32>
    %149 = arith.negf %147 : vector<8x128xf32>
    %150 = math.exp %149 : vector<8x128xf32>
    %cst_22 = arith.constant 1.000000e+00 : f32
    %151 = vector.broadcast %cst_22 : f32 to vector<8x128xf32>
    %152 = arith.addf %151, %150 : vector<8x128xf32>
    %153 = arith.divf %151, %152 : vector<8x128xf32>
    %154 = arith.select %12, %148, %153 : vector<8x128xi1>, vector<8x128xf32>
    %155 = vector.extract_strided_slice %154 {offsets = [0, 0], sizes = [8, 32], strides = [1, 1]} : vector<8x128xf32> to vector<8x32xf32>
    %156 = vector.extract_strided_slice %154 {offsets = [0, 32], sizes = [8, 32], strides = [1, 1]} : vector<8x128xf32> to vector<8x32xf32>
    %157 = vector.extract_strided_slice %154 {offsets = [0, 64], sizes = [8, 32], strides = [1, 1]} : vector<8x128xf32> to vector<8x32xf32>
    %158 = vector.extract_strided_slice %154 {offsets = [0, 96], sizes = [8, 32], strides = [1, 1]} : vector<8x128xf32> to vector<8x32xf32>
    %159 = arith.mulf %156, %142 : vector<8x32xf32>
    %160 = arith.mulf %155, %157 : vector<8x32xf32>
    %161 = arith.addf %159, %160 : vector<8x32xf32>
    %162 = math.tanh %161 : vector<8x32xf32>
    %163 = arith.mulf %158, %162 : vector<8x32xf32>
    %164 = tpu.iota {dimensions = array<i32: 1>} : vector<2x8xi32>
    %165 = tpu.iota {dimensions = array<i32: 0>} : vector<2x8xi32>
    %cst_23 = arith.constant 0.000000e+00 : f32
    %166 = vector.broadcast %cst_23 : f32 to vector<2x128xf32>
    %c0_24 = arith.constant 0 : index
    %c0_25 = arith.constant 0 : index
    %167 = vector.load %arg5[%c0_24, %c0_25] : memref<1x128xf32, #tpu.memory_space<vmem>>, vector<1x128xf32>
    %168 = vector.broadcast %167 : vector<1x128xf32> to vector<2x128xf32>
    %169 = arith.addf %166, %168 : vector<2x128xf32>
    %c4_i32 = arith.constant 4 : i32
    %170 = vector.broadcast %c4_i32 : i32 to vector<2x8xi32>
    %171 = arith.muli %165, %170 : vector<2x8xi32>
    %c0_i32 = arith.constant 0 : i32
    %172 = vector.broadcast %c0_i32 : i32 to vector<2x8xi32>
    %173 = arith.addi %171, %172 : vector<2x8xi32>
    %174 = arith.cmpi eq, %164, %173 : vector<2x8xi32>
    %cst_26 = arith.constant 1.000000e+00 : f32
    %cst_27 = arith.constant 0.000000e+00 : f32
    %175 = vector.broadcast %cst_26 : f32 to vector<2x8xf32>
    %176 = vector.broadcast %cst_27 : f32 to vector<2x8xf32>
    %177 = arith.select %174, %175, %176 : vector<2x8xi1>, vector<2x8xf32>
    %cst_28 = arith.constant dense<0.000000e+00> : vector<2x32xf32>
    %178 = tpu.matmul %177, %163, %cst_28 {dimension_numbers = #tpu.dot_dimension_numbers<[1], [0], [0], [1], [0, 0, 1, 1], [], []>} : vector<2x8xf32>, vector<8x32xf32>, vector<2x32xf32> -> vector<2x32xf32>
    %c0_29 = arith.constant 0 : index
    %c0_30 = arith.constant 0 : index
    %179 = vector.load %arg4[%c0_29, %c0_30] : memref<128x128xf32, #tpu.memory_space<vmem>>, vector<32x128xf32>
    %cst_31 = arith.constant dense<0.000000e+00> : vector<2x128xf32>
    %180 = tpu.matmul %178, %179, %cst_31 {dimension_numbers = #tpu.dot_dimension_numbers<[1], [0], [0], [1], [0, 0, 1, 1], [], []>} : vector<2x32xf32>, vector<32x128xf32>, vector<2x128xf32> -> vector<2x128xf32>
    %181 = arith.addf %169, %180 : vector<2x128xf32>
    %c4_i32_32 = arith.constant 4 : i32
    %182 = vector.broadcast %c4_i32_32 : i32 to vector<2x8xi32>
    %183 = arith.muli %165, %182 : vector<2x8xi32>
    %c1_i32 = arith.constant 1 : i32
    %184 = vector.broadcast %c1_i32 : i32 to vector<2x8xi32>
    %185 = arith.addi %183, %184 : vector<2x8xi32>
    %186 = arith.cmpi eq, %164, %185 : vector<2x8xi32>
    %cst_33 = arith.constant 1.000000e+00 : f32
    %cst_34 = arith.constant 0.000000e+00 : f32
    %187 = vector.broadcast %cst_33 : f32 to vector<2x8xf32>
    %188 = vector.broadcast %cst_34 : f32 to vector<2x8xf32>
    %189 = arith.select %186, %187, %188 : vector<2x8xi1>, vector<2x8xf32>
    %cst_35 = arith.constant dense<0.000000e+00> : vector<2x32xf32>
    %190 = tpu.matmul %189, %163, %cst_35 {dimension_numbers = #tpu.dot_dimension_numbers<[1], [0], [0], [1], [0, 0, 1, 1], [], []>} : vector<2x8xf32>, vector<8x32xf32>, vector<2x32xf32> -> vector<2x32xf32>
    %c32 = arith.constant 32 : index
    %c0_36 = arith.constant 0 : index
    %191 = vector.load %arg4[%c32, %c0_36] : memref<128x128xf32, #tpu.memory_space<vmem>>, vector<32x128xf32>
    %cst_37 = arith.constant dense<0.000000e+00> : vector<2x128xf32>
    %192 = tpu.matmul %190, %191, %cst_37 {dimension_numbers = #tpu.dot_dimension_numbers<[1], [0], [0], [1], [0, 0, 1, 1], [], []>} : vector<2x32xf32>, vector<32x128xf32>, vector<2x128xf32> -> vector<2x128xf32>
    %193 = arith.addf %181, %192 : vector<2x128xf32>
    %c4_i32_38 = arith.constant 4 : i32
    %194 = vector.broadcast %c4_i32_38 : i32 to vector<2x8xi32>
    %195 = arith.muli %165, %194 : vector<2x8xi32>
    %c2_i32 = arith.constant 2 : i32
    %196 = vector.broadcast %c2_i32 : i32 to vector<2x8xi32>
    %197 = arith.addi %195, %196 : vector<2x8xi32>
    %198 = arith.cmpi eq, %164, %197 : vector<2x8xi32>
    %cst_39 = arith.constant 1.000000e+00 : f32
    %cst_40 = arith.constant 0.000000e+00 : f32
    %199 = vector.broadcast %cst_39 : f32 to vector<2x8xf32>
    %200 = vector.broadcast %cst_40 : f32 to vector<2x8xf32>
    %201 = arith.select %198, %199, %200 : vector<2x8xi1>, vector<2x8xf32>
    %cst_41 = arith.constant dense<0.000000e+00> : vector<2x32xf32>
    %202 = tpu.matmul %201, %163, %cst_41 {dimension_numbers = #tpu.dot_dimension_numbers<[1], [0], [0], [1], [0, 0, 1, 1], [], []>} : vector<2x8xf32>, vector<8x32xf32>, vector<2x32xf32> -> vector<2x32xf32>
    %c64 = arith.constant 64 : index
    %c0_42 = arith.constant 0 : index
    %203 = vector.load %arg4[%c64, %c0_42] : memref<128x128xf32, #tpu.memory_space<vmem>>, vector<32x128xf32>
    %cst_43 = arith.constant dense<0.000000e+00> : vector<2x128xf32>
    %204 = tpu.matmul %202, %203, %cst_43 {dimension_numbers = #tpu.dot_dimension_numbers<[1], [0], [0], [1], [0, 0, 1, 1], [], []>} : vector<2x32xf32>, vector<32x128xf32>, vector<2x128xf32> -> vector<2x128xf32>
    %205 = arith.addf %193, %204 : vector<2x128xf32>
    %c4_i32_44 = arith.constant 4 : i32
    %206 = vector.broadcast %c4_i32_44 : i32 to vector<2x8xi32>
    %207 = arith.muli %165, %206 : vector<2x8xi32>
    %c3_i32 = arith.constant 3 : i32
    %208 = vector.broadcast %c3_i32 : i32 to vector<2x8xi32>
    %209 = arith.addi %207, %208 : vector<2x8xi32>
    %210 = arith.cmpi eq, %164, %209 : vector<2x8xi32>
    %cst_45 = arith.constant 1.000000e+00 : f32
    %cst_46 = arith.constant 0.000000e+00 : f32
    %211 = vector.broadcast %cst_45 : f32 to vector<2x8xf32>
    %212 = vector.broadcast %cst_46 : f32 to vector<2x8xf32>
    %213 = arith.select %210, %211, %212 : vector<2x8xi1>, vector<2x8xf32>
    %cst_47 = arith.constant dense<0.000000e+00> : vector<2x32xf32>
    %214 = tpu.matmul %213, %163, %cst_47 {dimension_numbers = #tpu.dot_dimension_numbers<[1], [0], [0], [1], [0, 0, 1, 1], [], []>} : vector<2x8xf32>, vector<8x32xf32>, vector<2x32xf32> -> vector<2x32xf32>
    %c96 = arith.constant 96 : index
    %c0_48 = arith.constant 0 : index
    %215 = vector.load %arg4[%c96, %c0_48] : memref<128x128xf32, #tpu.memory_space<vmem>>, vector<32x128xf32>
    %cst_49 = arith.constant dense<0.000000e+00> : vector<2x128xf32>
    %216 = tpu.matmul %214, %215, %cst_49 {dimension_numbers = #tpu.dot_dimension_numbers<[1], [0], [0], [1], [0, 0, 1, 1], [], []>} : vector<2x32xf32>, vector<32x128xf32>, vector<2x128xf32> -> vector<2x128xf32>
    %217 = arith.addf %205, %216 : vector<2x128xf32>
    %cst_50 = arith.constant dense<0xFF800000> : vector<2xf32>
    %218 = vector.multi_reduction <maximumf>, %217, %cst_50 [1] : vector<2x128xf32> to vector<2xf32>
    %219 = vector.shape_cast %218 : vector<2xf32> to vector<2x1xf32>
    %220 = vector.broadcast %219 : vector<2x1xf32> to vector<2x128xf32>
    %221 = arith.subf %217, %220 : vector<2x128xf32>
    %222 = math.exp %221 : vector<2x128xf32>
    %cst_51 = arith.constant dense<0.000000e+00> : vector<2xf32>
    %223 = vector.multi_reduction <add>, %222, %cst_51 [1] : vector<2x128xf32> to vector<2xf32>
    %224 = vector.shape_cast %223 : vector<2xf32> to vector<2x1xf32>
    %225 = vector.broadcast %224 : vector<2x1xf32> to vector<2x128xf32>
    %226 = arith.divf %222, %225 : vector<2x128xf32>
    %c0_52 = arith.constant 0 : index
    %c0_53 = arith.constant 0 : index
    %227 = vector.load %arg6[%c0_52, %c0_53] : memref<2x128xf32, #tpu.memory_space<vmem>>, vector<2x128xf32>
    tpu.vector_store %arg6[%c0_52, %c0_53], %226 {strides = array<i32>} : memref<2x128xf32, #tpu.memory_space<vmem>>, vector<2x128xf32>,
    return
  }
}

</mosaic_0001>

<llo_original>
// kernel: actor_forward.1
$region0: #{actor_forward.1}
  #allocation0 [shape = 'u32[]', space=smem, size = 0x4, offset = 0x4, fixed_abs, tag = 'smem constant byte address 0x4 - core index']
  #allocation1 [shape = 'u32[144,128]{1,0:T(1,128)}', space=vmem, size = 0x12000, scoped, tag = 'internal scratch']
  %s0 = inlined_call_operand.vmem [shape: f32[64,8], index: 0, kind: input, shape index: {}]
  %s1 = inlined_call_operand.vmem [shape: f32[8,128], index: 1, kind: input, shape index: {}]
  %s2 = inlined_call_operand.hbm [shape: f32[32,128], index: 2, kind: input, shape index: {}]
  %s3 = inlined_call_operand.vmem [shape: f32[1,128], index: 3, kind: input, shape index: {}]
  %s4 = inlined_call_operand.vmem [shape: f32[128,128], index: 4, kind: input, shape index: {}]
  %s5 = inlined_call_operand.vmem [shape: f32[1,128], index: 5, kind: input, shape index: {}]
  %s6 = inlined_call_operand.hbm [shape: f32[2,128], index: 6, kind: output, shape index: {}]
  %s7 = sld [smem:[#allocation0]]
  $region38: #{actor_forward.1} parent=0
    _
  %s9 = ssub.s32 1, %s7
  %s10 = scalar_select 0, %s9, %s7
  $region1: #{actor_forward.1} parent=0
    #allocation2 [shape = 'u8[16384]{0}', space=vmem, size = 0x4000, scoped, tag = 'input window, operand 2, single buffered']
    #allocation3 [shape = 's32[1]{0}', space=sflag, size = 0x4, scoped, tag = 'scoped memory for actor_forward.1']
    #allocation4 [shape = 's32[1]{0}', space=sflag, size = 0x4, scoped, tag = 'scoped memory for actor_forward.1']
    #allocation5 [shape = 'u8[1024]{0}', space=vmem, size = 0x400, scoped, tag = 'output window, operand 0, single buffered']
    %11 = vsyncpa [#allocation3], 0
    %12 = vsyncpa [#allocation4], 0
    // Predicated region
    $region2: #{actor_forward.1} parent=1 // pred_check
      _
    $region3: #{actor_forward.1} parent=1 // pred_check_branch
      %14 = sbr.rel (0) target = $region5
    $region4: #{actor_forward.1} parent=1 // pred_region
      _
    $region5: #{actor_forward.1} parent=1 // pred_fallthru
      _
    // Predicated region
    $region6: #{actor_forward.1} parent=1 // pred_check
      _
    $region7: #{actor_forward.1} parent=1 // pred_check_branch
      %16 = sbr.rel (0) target = $region9
    $region8: #{actor_forward.1} parent=1 // pred_region
      _
    $region9: #{actor_forward.1} parent=1 // pred_fallthru
      _
    // Predicated region
    $region10: #{actor_forward.1} parent=1 // pred_check
      _
    $region11: #{actor_forward.1} parent=1 // pred_check_branch
      %18 = sbr.rel (0) target = $region13
    $region12: #{actor_forward.1} parent=1 // pred_region
      %s20 = ssub.s32 512, 512
      %21 = vsyncadd [#allocation3], %s20
      %s22 = sshll.u32 [#allocation2], 4
      %s23 = int_to_ptr.vmem [resolvable:$true] %s22
      %28 = dma.hbm_to_vmem [thread:$0]  %s2, 512, %s23, [#allocation3], 128, 128, 8
    $region13: #{actor_forward.1} parent=1 // pred_fallthru
      _
    // Predicated region
    $region14: #{actor_forward.1} parent=1 // pred_check
      _
    $region15: #{actor_forward.1} parent=1 // pred_check_branch
      %30 = sbr.rel (0) target = $region17
    $region16: #{actor_forward.1} parent=1 // pred_region
      _
    $region17: #{actor_forward.1} parent=1 // pred_fallthru
      _
    // Predicated region
    $region18: #{actor_forward.1} parent=1 // pred_check
      _
    $region19: #{actor_forward.1} parent=1 // pred_check_branch
      %32 = sbr.rel (0) target = $region21
    $region20: #{actor_forward.1} parent=1 // pred_region
      _
    $region21: #{actor_forward.1} parent=1 // pred_fallthru
      _
    // Predicated region
    $region22: #{actor_forward.1} parent=1 // pred_check
      _
    $region23: #{actor_forward.1} parent=1 // pred_check_branch
      %34 = sbr.rel (0) target = $region25
    $region24: #{actor_forward.1} parent=1 // pred_region
      _
    $region25: #{actor_forward.1} parent=1 // pred_fallthru
      _
    // Predicated region
    $region26: #{actor_forward.1} parent=1 // pred_check
      _
    $region27: #{actor_forward.1} parent=1 // pred_check_branch
      %36 = sbr.rel (0) target = $region29
    $region28: #{actor_forward.1} parent=1 // pred_region
      %37 = dma.done [#allocation3], 512
    $region29: #{actor_forward.1} parent=1 // pred_fallthru
      _
    %v38 = vld [vmem:[%s0] sm:$0xff]
    %v39 = vld [vmem:[%s0 + $0x8] sm:$0xff]
    %v40 = vld [vmem:[%s0 + $0x10] sm:$0xff]
    %v41 = vld [vmem:[%s0 + $0x18] sm:$0xff]
    %v42 = vld [vmem:[%s0 + $0x20] sm:$0xff]
    %v43 = vld [vmem:[%s0 + $0x28] sm:$0xff]
    %v44 = vld [vmem:[%s0 + $0x30] sm:$0xff]
    %v45 = vld [vmem:[%s0 + $0x38] sm:$0xff]
    %v46 = vld [vmem:[%s1] sm:$0xff]
    %v47 = vld [vmem:[%s3] sm:$0x1]
    %v49 = vlaneseq
    %v50 = vshrl.u32 %v49, 7
    %v51 = vsub.s32 0, %v50
    %v52 = vrot.slane %v47, %v51
    %vm54 = vcmask 64512
    %v56 = vsel %vm54, %v38, 0
    %v59 = vsel %vm54, %v39, 0
    %v62 = vsel %vm54, %v40, 0
    %v65 = vsel %vm54, %v41, 0
    %v68 = vsel %vm54, %v42, 0
    %v71 = vsel %vm54, %v43, 0
    %v74 = vsel %vm54, %v44, 0
    %v77 = vsel %vm54, %v45, 0
    %79 = vmatprep.subr.mxu0 0.0
    %80 = vmatpush1.msra.mxu0 %v46
    %81 = vmatprep.subr.mxu0 0.0
    %82 = vmatpush1.msra.mxu0 0.0
    %83 = vmatprep.subr.mxu0 0.0
    %84 = vmatpush1.msra.mxu0 0.0
    %85 = vmatprep.subr.mxu0 0.0
    %86 = vmatpush1.msra.mxu0 0.0
    %87 = vmatprep.subr.mxu0 0.0
    %88 = vmatpush1.msra.mxu0 0.0
    %89 = vmatprep.subr.mxu0 0.0
    %90 = vmatpush1.msra.mxu0 0.0
    %91 = vmatprep.subr.mxu0 0.0
    %92 = vmatpush1.msra.mxu0 0.0
    %93 = vmatprep.subr.mxu0 0.0
    %94 = vmatpush1.msra.mxu0 0.0
    %95 = vmatprep.subr.mxu0 0.0
    %96 = vmatpush1.msra.mxu0 0.0
    %97 = vmatprep.subr.mxu0 0.0
    %98 = vmatpush1.msra.mxu0 0.0
    %99 = vmatprep.subr.mxu0 0.0
    %100 = vmatpush1.msra.mxu0 0.0
    %101 = vmatprep.subr.mxu0 0.0
    %102 = vmatpush1.msra.mxu0 0.0
    %103 = vmatprep.subr.mxu0 0.0
    %104 = vmatpush1.msra.mxu0 0.0
    %105 = vmatprep.subr.mxu0 0.0
    %106 = vmatpush1.msra.mxu0 0.0
    %107 = vmatprep.subr.mxu0 0.0
    %108 = vmatpush1.msra.mxu0 0.0
    %109 = vmatprep.subr.mxu0 0.0
    %110 = vmatpush1.msra.mxu0 0.0
    %111 = vmatprep.subr.mxu0 0.0
    %112 = vmatpush1.msra.mxu0 0.0
    %113 = vmatprep.subr.mxu0 0.0
    %114 = vmatpush1.msra.mxu0 0.0
    %115 = vmatprep.subr.mxu0 0.0
    %116 = vmatpush1.msra.mxu0 0.0
    %117 = vmatprep.subr.mxu0 0.0
    %118 = vmatpush1.msra.mxu0 0.0
    %119 = vmatprep.subr.mxu0 0.0
    %120 = vmatpush1.msra.mxu0 0.0
    %121 = vmatprep.subr.mxu0 0.0
    %122 = vmatpush1.msra.mxu0 0.0
    %123 = vmatprep.subr.mxu0 0.0
    %124 = vmatpush1.msra.mxu0 0.0
    %125 = vmatprep.subr.mxu0 0.0
    %126 = vmatpush1.msra.mxu0 0.0
    %127 = vmatprep.subr.mxu0 0.0
    %128 = vmatpush1.msra.mxu0 0.0
    %129 = vmatprep.subr.mxu0 0.0
    %130 = vmatpush1.msra.mxu0 0.0
    %131 = vmatprep.subr.mxu0 0.0
    %132 = vmatpush1.msra.mxu0 0.0
    %133 = vmatprep.subr.mxu0 0.0
    %134 = vmatpush1.msra.mxu0 0.0
    %135 = vmatprep.subr.mxu0 0.0
    %136 = vmatpush1.msra.mxu0 0.0
    %137 = vmatprep.subr.mxu0 0.0
    %138 = vmatpush1.msra.mxu0 0.0
    %139 = vmatprep.subr.mxu0 0.0
    %140 = vmatpush1.msra.mxu0 0.0
    %141 = vmatprep.subr.mxu0 0.0
    %142 = vmatpush1.msra.mxu0 0.0
    %143 = vmatprep.mubr.f32.mxu0 0.0
    %144 = vmatmul.mubr.f32.gmra.mrb[0].mxu0 %v56
    %v145 = vpop.f32.mrb[0].mxu0
    %v146 = vadd.f32 %v52, %v145
    %v147 = vpop.f32.mrb[0].mxu0
    %148 = vmatprep.mubr.f32.mxu0 0.0
    %149 = vmatmul.mubr.f32.gmra.mrb[0].mxu0 %v59
    %v150 = vpop.f32.mrb[0].mxu0
    %v151 = vadd.f32 %v52, %v150
    %v152 = vpop.f32.mrb[0].mxu0
    %153 = vmatprep.mubr.f32.mxu0 0.0
    %154 = vmatmul.mubr.f32.gmra.mrb[0].mxu0 %v62
    %v155 = vpop.f32.mrb[0].mxu0
    %v156 = vadd.f32 %v52, %v155
    %v157 = vpop.f32.mrb[0].mxu0
    %158 = vmatprep.mubr.f32.mxu0 0.0
    %159 = vmatmul.mubr.f32.gmra.mrb[0].mxu0 %v65
    %v160 = vpop.f32.mrb[0].mxu0
    %v161 = vadd.f32 %v52, %v160
    %v162 = vpop.f32.mrb[0].mxu0
    %163 = vmatprep.mubr.f32.mxu0 0.0
    %164 = vmatmul.mubr.f32.gmra.mrb[0].mxu0 %v68
    %v165 = vpop.f32.mrb[0].mxu0
    %v166 = vadd.f32 %v52, %v165
    %v167 = vpop.f32.mrb[0].mxu0
    %168 = vmatprep.mubr.f32.mxu0 0.0
    %169 = vmatmul.mubr.f32.gmra.mrb[0].mxu0 %v71
    %v170 = vpop.f32.mrb[0].mxu0
    %v171 = vadd.f32 %v52, %v170
    %v172 = vpop.f32.mrb[0].mxu0
    %173 = vmatprep.mubr.f32.mxu0 0.0
    %174 = vmatmul.mubr.f32.gmra.mrb[0].mxu0 %v74
    %v175 = vpop.f32.mrb[0].mxu0
    %v176 = vadd.f32 %v52, %v175
    %v177 = vpop.f32.mrb[0].mxu0
    %178 = vmatprep.mubr.f32.mxu0 0.0
    %179 = vmatmul.mubr.f32.gmra.mrb[0].mxu0 %v77
    %v180 = vpop.f32.mrb[0].mxu0
    %v181 = vadd.f32 %v52, %v180
    %v182 = vpop.f32.mrb[0].mxu0
    %183 = vdwg.mxu0
    %v184 = vld [vmem:[#allocation2] sm:$0xff]
    %v185 = vld [vmem:[#allocation2 + $0x8] sm:$0xff]
    %v186 = vld [vmem:[#allocation2 + $0x10] sm:$0xff]
    %v187 = vld [vmem:[#allocation2 + $0x18] sm:$0xff]
    %v188 = vlaneseq
    %v189 = vand.u32 %v188, 127
    %vm190 = vcmp.ge.s32.totalorder %v189, 64
    %vm191 = vcmp.lt.s32.totalorder %v189, 96
    %vm192 = vmand %vm190, %vm191
    %v193 = vtanh.pop %v146
    %v194 = vxor.u32 %v146, 2147483648
    %v195 = vmul.f32 %v194, 1.442695
    %v196 = vpow.pop %v195
    %v197 = vadd.f32 %v196, 1.0
    %v198 = vrcp.pop %v197
    %v199 = vmul.f32 1.0, %v198
    %v200 = vsel %vm192, %v193, %v199
    %v201 = vmul.f32 %v200, 0.0
    %203 = vrot.lane.b32.xlu0 %v200, 64
    %v204 = vpop.permute.xlu0 %203
    %v206 = vmul.f32 %v200, %v204
    %208 = vrot.lane.b32.xlu0 %v206, 32
    %v209 = vpop.permute.xlu0 %208
    %v211 = vadd.f32 %v201, %v209
    %v212 = vtanh.pop %v211
    %214 = vrot.lane.b32.xlu0 %v212, 64
    %v215 = vpop.permute.xlu0 %214
    %v217 = vmul.f32 %v200, %v215
    %219 = vrot.lane.b32.xlu0 %v217, 32
    %v220 = vpop.permute.xlu0 %219
    %vm221 = vcmask 261120
    %v222 = vsel %vm221, %v220, 0
    %224 = vmatprep.subr.mxu0 0.0
    %225 = vmatpush1.msra.mxu0 %v184
    %226 = vmatprep.subr.mxu0 0.0
    %227 = vmatpush1.msra.mxu0 %v185
    %228 = vmatprep.subr.mxu0 0.0
    %229 = vmatpush1.msra.mxu0 %v186
    %230 = vmatprep.subr.mxu0 0.0
    %231 = vmatpush1.msra.mxu0 %v187
    %232 = vmatprep.subr.mxu0 0.0
    %233 = vmatpush1.msra.mxu0 0.0
    %234 = vmatprep.subr.mxu0 0.0
    %235 = vmatpush1.msra.mxu0 0.0
    %236 = vmatprep.subr.mxu0 0.0
    %237 = vmatpush1.msra.mxu0 0.0
    %238 = vmatprep.subr.mxu0 0.0
    %239 = vmatpush1.msra.mxu0 0.0
    %240 = vmatprep.subr.mxu0 0.0
    %241 = vmatpush1.msra.mxu0 0.0
    %242 = vmatprep.subr.mxu0 0.0
    %243 = vmatpush1.msra.mxu0 0.0
    %244 = vmatprep.subr.mxu0 0.0
    %245 = vmatpush1.msra.mxu0 0.0
    %246 = vmatprep.subr.mxu0 0.0
    %247 = vmatpush1.msra.mxu0 0.0
    %248 = vmatprep.subr.mxu0 0.0
    %249 = vmatpush1.msra.mxu0 0.0
    %250 = vmatprep.subr.mxu0 0.0
    %251 = vmatpush1.msra.mxu0 0.0
    %252 = vmatprep.subr.mxu0 0.0
    %253 = vmatpush1.msra.mxu0 0.0
    %254 = vmatprep.subr.mxu0 0.0
    %255 = vmatpush1.msra.mxu0 0.0
    %256 = vmatprep.subr.mxu0 0.0
    %257 = vmatpush1.msra.mxu0 0.0
    %258 = vmatprep.subr.mxu0 0.0
    %259 = vmatpush1.msra.mxu0 0.0
    %260 = vmatprep.subr.mxu0 0.0
    %261 = vmatpush1.msra.mxu0 0.0
    %262 = vmatprep.subr.mxu0 0.0
    %263 = vmatpush1.msra.mxu0 0.0
    %264 = vmatprep.subr.mxu0 0.0
    %265 = vmatpush1.msra.mxu0 0.0
    %266 = vmatprep.subr.mxu0 0.0
    %267 = vmatpush1.msra.mxu0 0.0
    %268 = vmatprep.subr.mxu0 0.0
    %269 = vmatpush1.msra.mxu0 0.0
    %270 = vmatprep.subr.mxu0 0.0
    %271 = vmatpush1.msra.mxu0 0.0
    %272 = vmatprep.subr.mxu0 0.0
    %273 = vmatpush1.msra.mxu0 0.0
    %274 = vmatprep.subr.mxu0 0.0
    %275 = vmatpush1.msra.mxu0 0.0
    %276 = vmatprep.subr.mxu0 0.0
    %277 = vmatpush1.msra.mxu0 0.0
    %278 = vmatprep.subr.mxu0 0.0
    %279 = vmatpush1.msra.mxu0 0.0
    %280 = vmatprep.subr.mxu0 0.0
    %281 = vmatpush1.msra.mxu0 0.0
    %282 = vmatprep.subr.mxu0 0.0
    %283 = vmatpush1.msra.mxu0 0.0
    %284 = vmatprep.subr.mxu0 0.0
    %285 = vmatpush1.msra.mxu0 0.0
    %286 = vmatprep.subr.mxu0 0.0
    %287 = vmatpush1.msra.mxu0 0.0
    %288 = vmatprep.mubr.f32.mxu0 0.0
    %289 = vmatmul.mubr.f32.gmra.mrb[0].mxu0 %v222
    %v290 = vpop.f32.mrb[0].mxu0
    %v291 = vadd.f32 0.0, %v290
    %v292 = vpop.f32.mrb[0].mxu0
    %293 = vdwg.mxu0
    %v294 = vadd.f32 %v151, %v291
    %v295 = vtanh.pop %v294
    %v296 = vxor.u32 %v294, 2147483648
    %v297 = vmul.f32 %v296, 1.442695
    %v298 = vpow.pop %v297
    %v299 = vadd.f32 %v298, 1.0
    %v300 = vrcp.pop %v299
    %v301 = vmul.f32 1.0, %v300
    %v302 = vsel %vm192, %v295, %v301
    %v303 = vmul.f32 %v302, %v211
    %305 = vrot.lane.b32.xlu0 %v302, 64
    %v306 = vpop.permute.xlu0 %305
    %v308 = vmul.f32 %v302, %v306
    %310 = vrot.lane.b32.xlu0 %v308, 32
    %v311 = vpop.permute.xlu0 %310
    %v313 = vadd.f32 %v303, %v311
    %v314 = vtanh.pop %v313
    %316 = vrot.lane.b32.xlu0 %v314, 64
    %v317 = vpop.permute.xlu0 %316
    %v319 = vmul.f32 %v302, %v317
    %321 = vrot.lane.b32.xlu0 %v319, 32
    %v322 = vpop.permute.xlu0 %321
    %v323 = vsel %vm221, %v322, 0
    %325 = vmatprep.subr.mxu0 0.0
    %326 = vmatpush1.msra.mxu0 %v184
    %327 = vmatprep.subr.mxu0 0.0
    %328 = vmatpush1.msra.mxu0 %v185
    %329 = vmatprep.subr.mxu0 0.0
    %330 = vmatpush1.msra.mxu0 %v186
    %331 = vmatprep.subr.mxu0 0.0
    %332 = vmatpush1.msra.mxu0 %v187
    %333 = vmatprep.subr.mxu0 0.0
    %334 = vmatpush1.msra.mxu0 0.0
    %335 = vmatprep.subr.mxu0 0.0
    %336 = vmatpush1.msra.mxu0 0.0
    %337 = vmatprep.subr.mxu0 0.0
    %338 = vmatpush1.msra.mxu0 0.0
    %339 = vmatprep.subr.mxu0 0.0
    %340 = vmatpush1.msra.mxu0 0.0
    %341 = vmatprep.subr.mxu0 0.0
    %342 = vmatpush1.msra.mxu0 0.0
    %343 = vmatprep.subr.mxu0 0.0
    %344 = vmatpush1.msra.mxu0 0.0
    %345 = vmatprep.subr.mxu0 0.0
    %346 = vmatpush1.msra.mxu0 0.0
    %347 = vmatprep.subr.mxu0 0.0
    %348 = vmatpush1.msra.mxu0 0.0
    %349 = vmatprep.subr.mxu0 0.0
    %350 = vmatpush1.msra.mxu0 0.0
    %351 = vmatprep.subr.mxu0 0.0
    %352 = vmatpush1.msra.mxu0 0.0
    %353 = vmatprep.subr.mxu0 0.0
    %354 = vmatpush1.msra.mxu0 0.0
    %355 = vmatprep.subr.mxu0 0.0
    %356 = vmatpush1.msra.mxu0 0.0
    %357 = vmatprep.subr.mxu0 0.0
    %358 = vmatpush1.msra.mxu0 0.0
    %359 = vmatprep.subr.mxu0 0.0
    %360 = vmatpush1.msra.mxu0 0.0
    %361 = vmatprep.subr.mxu0 0.0
    %362 = vmatpush1.msra.mxu0 0.0
    %363 = vmatprep.subr.mxu0 0.0
    %364 = vmatpush1.msra.mxu0 0.0
    %365 = vmatprep.subr.mxu0 0.0
    %366 = vmatpush1.msra.mxu0 0.0
    %367 = vmatprep.subr.mxu0 0.0
    %368 = vmatpush1.msra.mxu0 0.0
    %369 = vmatprep.subr.mxu0 0.0
    %370 = vmatpush1.msra.mxu0 0.0
    %371 = vmatprep.subr.mxu0 0.0
    %372 = vmatpush1.msra.mxu0 0.0
    %373 = vmatprep.subr.mxu0 0.0
    %374 = vmatpush1.msra.mxu0 0.0
    %375 = vmatprep.subr.mxu0 0.0
    %376 = vmatpush1.msra.mxu0 0.0
    %377 = vmatprep.subr.mxu0 0.0
    %378 = vmatpush1.msra.mxu0 0.0
    %379 = vmatprep.subr.mxu0 0.0
    %380 = vmatpush1.msra.mxu0 0.0
    %381 = vmatprep.subr.mxu0 0.0
    %382 = vmatpush1.msra.mxu0 0.0
    %383 = vmatprep.subr.mxu0 0.0
    %384 = vmatpush1.msra.mxu0 0.0
    %385 = vmatprep.subr.mxu0 0.0
    %386 = vmatpush1.msra.mxu0 0.0
    %387 = vmatprep.subr.mxu0 0.0
    %388 = vmatpush1.msra.mxu0 0.0
    %389 = vmatprep.mubr.f32.mxu0 0.0
    %390 = vmatmul.mubr.f32.gmra.mrb[0].mxu0 %v323
    %v391 = vpop.f32.mrb[0].mxu0
    %v392 = vadd.f32 0.0, %v391
    %v393 = vpop.f32.mrb[0].mxu0
    %394 = vdwg.mxu0
    %v395 = vadd.f32 %v156, %v392
    %v396 = vtanh.pop %v395
    %v397 = vxor.u32 %v395, 2147483648
    %v398 = vmul.f32 %v397, 1.442695
    %v399 = vpow.pop %v398
    %v400 = vadd.f32 %v399, 1.0
    %v401 = vrcp.pop %v400
    %v402 = vmul.f32 1.0, %v401
    %v403 = vsel %vm192, %v396, %v402
    %v404 = vmul.f32 %v403, %v313
    %406 = vrot.lane.b32.xlu0 %v403, 64
    %v407 = vpop.permute.xlu0 %406
    %v409 = vmul.f32 %v403, %v407
    %411 = vrot.lane.b32.xlu0 %v409, 32
    %v412 = vpop.permute.xlu0 %411
    %v414 = vadd.f32 %v404, %v412
    %v415 = vtanh.pop %v414
    %417 = vrot.lane.b32.xlu0 %v415, 64
    %v418 = vpop.permute.xlu0 %417
    %v420 = vmul.f32 %v403, %v418
    %422 = vrot.lane.b32.xlu0 %v420, 32
    %v423 = vpop.permute.xlu0 %422
    %v424 = vsel %vm221, %v423, 0
    %426 = vmatprep.subr.mxu0 0.0
    %427 = vmatpush1.msra.mxu0 %v184
    %428 = vmatprep.subr.mxu0 0.0
    %429 = vmatpush1.msra.mxu0 %v185
    %430 = vmatprep.subr.mxu0 0.0
    %431 = vmatpush1.msra.mxu0 %v186
    %432 = vmatprep.subr.mxu0 0.0
    %433 = vmatpush1.msra.mxu0 %v187
    %434 = vmatprep.subr.mxu0 0.0
    %435 = vmatpush1.msra.mxu0 0.0
    %436 = vmatprep.subr.mxu0 0.0
    %437 = vmatpush1.msra.mxu0 0.0
    %438 = vmatprep.subr.mxu0 0.0
    %439 = vmatpush1.msra.mxu0 0.0
    %440 = vmatprep.subr.mxu0 0.0
    %441 = vmatpush1.msra.mxu0 0.0
    %442 = vmatprep.subr.mxu0 0.0
    %443 = vmatpush1.msra.mxu0 0.0
    %444 = vmatprep.subr.mxu0 0.0
    %445 = vmatpush1.msra.mxu0 0.0
    %446 = vmatprep.subr.mxu0 0.0
    %447 = vmatpush1.msra.mxu0 0.0
    %448 = vmatprep.subr.mxu0 0.0
    %449 = vmatpush1.msra.mxu0 0.0
    %450 = vmatprep.subr.mxu0 0.0
    %451 = vmatpush1.msra.mxu0 0.0
    %452 = vmatprep.subr.mxu0 0.0
    %453 = vmatpush1.msra.mxu0 0.0
    %454 = vmatprep.subr.mxu0 0.0
    %455 = vmatpush1.msra.mxu0 0.0
    %456 = vmatprep.subr.mxu0 0.0
    %457 = vmatpush1.msra.mxu0 0.0
    %458 = vmatprep.subr.mxu0 0.0
    %459 = vmatpush1.msra.mxu0 0.0
    %460 = vmatprep.subr.mxu0 0.0
    %461 = vmatpush1.msra.mxu0 0.0
    %462 = vmatprep.subr.mxu0 0.0
    %463 = vmatpush1.msra.mxu0 0.0
    %464 = vmatprep.subr.mxu0 0.0
    %465 = vmatpush1.msra.mxu0 0.0
    %466 = vmatprep.subr.mxu0 0.0
    %467 = vmatpush1.msra.mxu0 0.0
    %468 = vmatprep.subr.mxu0 0.0
    %469 = vmatpush1.msra.mxu0 0.0
    %470 = vmatprep.subr.mxu0 0.0
    %471 = vmatpush1.msra.mxu0 0.0
    %472 = vmatprep.subr.mxu0 0.0
    %473 = vmatpush1.msra.mxu0 0.0
    %474 = vmatprep.subr.mxu0 0.0
    %475 = vmatpush1.msra.mxu0 0.0
    %476 = vmatprep.subr.mxu0 0.0
    %477 = vmatpush1.msra.mxu0 0.0
    %478 = vmatprep.subr.mxu0 0.0
    %479 = vmatpush1.msra.mxu0 0.0
    %480 = vmatprep.subr.mxu0 0.0
    %481 = vmatpush1.msra.mxu0 0.0
    %482 = vmatprep.subr.mxu0 0.0
    %483 = vmatpush1.msra.mxu0 0.0
    %484 = vmatprep.subr.mxu0 0.0
    %485 = vmatpush1.msra.mxu0 0.0
    %486 = vmatprep.subr.mxu0 0.0
    %487 = vmatpush1.msra.mxu0 0.0
    %488 = vmatprep.subr.mxu0 0.0
    %489 = vmatpush1.msra.mxu0 0.0
    %490 = vmatprep.mubr.f32.mxu0 0.0
    %491 = vmatmul.mubr.f32.gmra.mrb[0].mxu0 %v424
    %v492 = vpop.f32.mrb[0].mxu0
    %v493 = vadd.f32 0.0, %v492
    %v494 = vpop.f32.mrb[0].mxu0
    %495 = vdwg.mxu0
    %v496 = vadd.f32 %v161, %v493
    %v497 = vtanh.pop %v496
    %v498 = vxor.u32 %v496, 2147483648
    %v499 = vmul.f32 %v498, 1.442695
    %v500 = vpow.pop %v499
    %v501 = vadd.f32 %v500, 1.0
    %v502 = vrcp.pop %v501
    %v503 = vmul.f32 1.0, %v502
    %v504 = vsel %vm192, %v497, %v503
    %v505 = vmul.f32 %v504, %v414
    %507 = vrot.lane.b32.xlu0 %v504, 64
    %v508 = vpop.permute.xlu0 %507
    %v510 = vmul.f32 %v504, %v508
    %512 = vrot.lane.b32.xlu0 %v510, 32
    %v513 = vpop.permute.xlu0 %512
    %v515 = vadd.f32 %v505, %v513
    %v516 = vtanh.pop %v515
    %518 = vrot.lane.b32.xlu0 %v516, 64
    %v519 = vpop.permute.xlu0 %518
    %v521 = vmul.f32 %v504, %v519
    %523 = vrot.lane.b32.xlu0 %v521, 32
    %v524 = vpop.permute.xlu0 %523
    %v525 = vsel %vm221, %v524, 0
    %527 = vmatprep.subr.mxu0 0.0
    %528 = vmatpush1.msra.mxu0 %v184
    %529 = vmatprep.subr.mxu0 0.0
    %530 = vmatpush1.msra.mxu0 %v185
    %531 = vmatprep.subr.mxu0 0.0
    %532 = vmatpush1.msra.mxu0 %v186
    %533 = vmatprep.subr.mxu0 0.0
    %534 = vmatpush1.msra.mxu0 %v187
    %535 = vmatprep.subr.mxu0 0.0
    %536 = vmatpush1.msra.mxu0 0.0
    %537 = vmatprep.subr.mxu0 0.0
    %538 = vmatpush1.msra.mxu0 0.0
    %539 = vmatprep.subr.mxu0 0.0
    %540 = vmatpush1.msra.mxu0 0.0
    %541 = vmatprep.subr.mxu0 0.0
    %542 = vmatpush1.msra.mxu0 0.0
    %543 = vmatprep.subr.mxu0 0.0
    %544 = vmatpush1.msra.mxu0 0.0
    %545 = vmatprep.subr.mxu0 0.0
    %546 = vmatpush1.msra.mxu0 0.0
    %547 = vmatprep.subr.mxu0 0.0
    %548 = vmatpush1.msra.mxu0 0.0
    %549 = vmatprep.subr.mxu0 0.0
    %550 = vmatpush1.msra.mxu0 0.0
    %551 = vmatprep.subr.mxu0 0.0
    %552 = vmatpush1.msra.mxu0 0.0
    %553 = vmatprep.subr.mxu0 0.0
    %554 = vmatpush1.msra.mxu0 0.0
    %555 = vmatprep.subr.mxu0 0.0
    %556 = vmatpush1.msra.mxu0 0.0
    %557 = vmatprep.subr.mxu0 0.0
    %558 = vmatpush1.msra.mxu0 0.0
    %559 = vmatprep.subr.mxu0 0.0
    %560 = vmatpush1.msra.mxu0 0.0
    %561 = vmatprep.subr.mxu0 0.0
    %562 = vmatpush1.msra.mxu0 0.0
    %563 = vmatprep.subr.mxu0 0.0
    %564 = vmatpush1.msra.mxu0 0.0
    %565 = vmatprep.subr.mxu0 0.0
    %566 = vmatpush1.msra.mxu0 0.0
    %567 = vmatprep.subr.mxu0 0.0
    %568 = vmatpush1.msra.mxu0 0.0
    %569 = vmatprep.subr.mxu0 0.0
    %570 = vmatpush1.msra.mxu0 0.0
    %571 = vmatprep.subr.mxu0 0.0
    %572 = vmatpush1.msra.mxu0 0.0
    %573 = vmatprep.subr.mxu0 0.0
    %574 = vmatpush1.msra.mxu0 0.0
    %575 = vmatprep.subr.mxu0 0.0
    %576 = vmatpush1.msra.mxu0 0.0
    %577 = vmatprep.subr.mxu0 0.0
    %578 = vmatpush1.msra.mxu0 0.0
    %579 = vmatprep.subr.mxu0 0.0
    %580 = vmatpush1.msra.mxu0 0.0
    %581 = vmatprep.subr.mxu0 0.0
    %582 = vmatpush1.msra.mxu0 0.0
    %583 = vmatprep.subr.mxu0 0.0
    %584 = vmatpush1.msra.mxu0 0.0
    %585 = vmatprep.subr.mxu0 0.0
    %586 = vmatpush1.msra.mxu0 0.0
    %587 = vmatprep.subr.mxu0 0.0
    %588 = vmatpush1.msra.mxu0 0.0
    %589 = vmatprep.subr.mxu0 0.0
    %590 = vmatpush1.msra.mxu0 0.0
    %591 = vmatprep.mubr.f32.mxu0 0.0
    %592 = vmatmul.mubr.f32.gmra.mrb[0].mxu0 %v525
    %v593 = vpop.f32.mrb[0].mxu0
    %v594 = vadd.f32 0.0, %v593
    %v595 = vpop.f32.mrb[0].mxu0
    %596 = vdwg.mxu0
    %v597 = vadd.f32 %v166, %v594
    %v598 = vtanh.pop %v597
    %v599 = vxor.u32 %v597, 2147483648
    %v600 = vmul.f32 %v599, 1.442695
    %v601 = vpow.pop %v600
    %v602 = vadd.f32 %v601, 1.0
    %v603 = vrcp.pop %v602
    %v604 = vmul.f32 1.0, %v603
    %v605 = vsel %vm192, %v598, %v604
    %v606 = vmul.f32 %v605, %v515
    %608 = vrot.lane.b32.xlu0 %v605, 64
    %v609 = vpop.permute.xlu0 %608
    %v611 = vmul.f32 %v605, %v609
    %613 = vrot.lane.b32.xlu0 %v611, 32
    %v614 = vpop.permute.xlu0 %613
    %v616 = vadd.f32 %v606, %v614
    %v617 = vtanh.pop %v616
    %619 = vrot.lane.b32.xlu0 %v617, 64
    %v620 = vpop.permute.xlu0 %619
    %v622 = vmul.f32 %v605, %v620
    %624 = vrot.lane.b32.xlu0 %v622, 32
    %v625 = vpop.permute.xlu0 %624
    %v626 = vsel %vm221, %v625, 0
    %628 = vmatprep.subr.mxu0 0.0
    %629 = vmatpush1.msra.mxu0 %v184
    %630 = vmatprep.subr.mxu0 0.0
    %631 = vmatpush1.msra.mxu0 %v185
    %632 = vmatprep.subr.mxu0 0.0
    %633 = vmatpush1.msra.mxu0 %v186
    %634 = vmatprep.subr.mxu0 0.0
    %635 = vmatpush1.msra.mxu0 %v187
    %636 = vmatprep.subr.mxu0 0.0
    %637 = vmatpush1.msra.mxu0 0.0
    %638 = vmatprep.subr.mxu0 0.0
    %639 = vmatpush1.msra.mxu0 0.0
    %640 = vmatprep.subr.mxu0 0.0
    %641 = vmatpush1.msra.mxu0 0.0
    %642 = vmatprep.subr.mxu0 0.0
    %643 = vmatpush1.msra.mxu0 0.0
    %644 = vmatprep.subr.mxu0 0.0
    %645 = vmatpush1.msra.mxu0 0.0
    %646 = vmatprep.subr.mxu0 0.0
    %647 = vmatpush1.msra.mxu0 0.0
    %648 = vmatprep.subr.mxu0 0.0
    %649 = vmatpush1.msra.mxu0 0.0
    %650 = vmatprep.subr.mxu0 0.0
    %651 = vmatpush1.msra.mxu0 0.0
    %652 = vmatprep.subr.mxu0 0.0
    %653 = vmatpush1.msra.mxu0 0.0
    %654 = vmatprep.subr.mxu0 0.0
    %655 = vmatpush1.msra.mxu0 0.0
    %656 = vmatprep.subr.mxu0 0.0
    %657 = vmatpush1.msra.mxu0 0.0
    %658 = vmatprep.subr.mxu0 0.0
    %659 = vmatpush1.msra.mxu0 0.0
    %660 = vmatprep.subr.mxu0 0.0
    %661 = vmatpush1.msra.mxu0 0.0
    %662 = vmatprep.subr.mxu0 0.0
    %663 = vmatpush1.msra.mxu0 0.0
    %664 = vmatprep.subr.mxu0 0.0
    %665 = vmatpush1.msra.mxu0 0.0
    %666 = vmatprep.subr.mxu0 0.0
    %667 = vmatpush1.msra.mxu0 0.0
    %668 = vmatprep.subr.mxu0 0.0
    %669 = vmatpush1.msra.mxu0 0.0
    %670 = vmatprep.subr.mxu0 0.0
    %671 = vmatpush1.msra.mxu0 0.0
    %672 = vmatprep.subr.mxu0 0.0
    %673 = vmatpush1.msra.mxu0 0.0
    %674 = vmatprep.subr.mxu0 0.0
    %675 = vmatpush1.msra.mxu0 0.0
    %676 = vmatprep.subr.mxu0 0.0
    %677 = vmatpush1.msra.mxu0 0.0
    %678 = vmatprep.subr.mxu0 0.0
    %679 = vmatpush1.msra.mxu0 0.0
    %680 = vmatprep.subr.mxu0 0.0
    %681 = vmatpush1.msra.mxu0 0.0
    %682 = vmatprep.subr.mxu0 0.0
    %683 = vmatpush1.msra.mxu0 0.0
    %684 = vmatprep.subr.mxu0 0.0
    %685 = vmatpush1.msra.mxu0 0.0
    %686 = vmatprep.subr.mxu0 0.0
    %687 = vmatpush1.msra.mxu0 0.0
    %688 = vmatprep.subr.mxu0 0.0
    %689 = vmatpush1.msra.mxu0 0.0
    %690 = vmatprep.subr.mxu0 0.0
    %691 = vmatpush1.msra.mxu0 0.0
    %692 = vmatprep.mubr.f32.mxu0 0.0
    %693 = vmatmul.mubr.f32.gmra.mrb[0].mxu0 %v626
    %v694 = vpop.f32.mrb[0].mxu0
    %v695 = vadd.f32 0.0, %v694
    %v696 = vpop.f32.mrb[0].mxu0
    %697 = vdwg.mxu0
    %v698 = vadd.f32 %v171, %v695
    %v699 = vtanh.pop %v698
    %v700 = vxor.u32 %v698, 2147483648
    %v701 = vmul.f32 %v700, 1.442695
    %v702 = vpow.pop %v701
    %v703 = vadd.f32 %v702, 1.0
    %v704 = vrcp.pop %v703
    %v705 = vmul.f32 1.0, %v704
    %v706 = vsel %vm192, %v699, %v705
    %v707 = vmul.f32 %v706, %v616
    %709 = vrot.lane.b32.xlu0 %v706, 64
    %v710 = vpop.permute.xlu0 %709
    %v712 = vmul.f32 %v706, %v710
    %714 = vrot.lane.b32.xlu0 %v712, 32
    %v715 = vpop.permute.xlu0 %714
    %v717 = vadd.f32 %v707, %v715
    %v718 = vtanh.pop %v717
    %720 = vrot.lane.b32.xlu0 %v718, 64
    %v721 = vpop.permute.xlu0 %720
    %v723 = vmul.f32 %v706, %v721
    %725 = vrot.lane.b32.xlu0 %v723, 32
    %v726 = vpop.permute.xlu0 %725
    %v727 = vsel %vm221, %v726, 0
    %729 = vmatprep.subr.mxu0 0.0
    %730 = vmatpush1.msra.mxu0 %v184
    %731 = vmatprep.subr.mxu0 0.0
    %732 = vmatpush1.msra.mxu0 %v185
    %733 = vmatprep.subr.mxu0 0.0
    %734 = vmatpush1.msra.mxu0 %v186
    %735 = vmatprep.subr.mxu0 0.0
    %736 = vmatpush1.msra.mxu0 %v187
    %737 = vmatprep.subr.mxu0 0.0
    %738 = vmatpush1.msra.mxu0 0.0
    %739 = vmatprep.subr.mxu0 0.0
    %740 = vmatpush1.msra.mxu0 0.0
    %741 = vmatprep.subr.mxu0 0.0
    %742 = vmatpush1.msra.mxu0 0.0
    %743 = vmatprep.subr.mxu0 0.0
    %744 = vmatpush1.msra.mxu0 0.0
    %745 = vmatprep.subr.mxu0 0.0
    %746 = vmatpush1.msra.mxu0 0.0
    %747 = vmatprep.subr.mxu0 0.0
    %748 = vmatpush1.msra.mxu0 0.0
    %749 = vmatprep.subr.mxu0 0.0
    %750 = vmatpush1.msra.mxu0 0.0
    %751 = vmatprep.subr.mxu0 0.0
    %752 = vmatpush1.msra.mxu0 0.0
    %753 = vmatprep.subr.mxu0 0.0
    %754 = vmatpush1.msra.mxu0 0.0
    %755 = vmatprep.subr.mxu0 0.0
    %756 = vmatpush1.msra.mxu0 0.0
    %757 = vmatprep.subr.mxu0 0.0
    %758 = vmatpush1.msra.mxu0 0.0
    %759 = vmatprep.subr.mxu0 0.0
    %760 = vmatpush1.msra.mxu0 0.0
    %761 = vmatprep.subr.mxu0 0.0
    %762 = vmatpush1.msra.mxu0 0.0
    %763 = vmatprep.subr.mxu0 0.0
    %764 = vmatpush1.msra.mxu0 0.0
    %765 = vmatprep.subr.mxu0 0.0
    %766 = vmatpush1.msra.mxu0 0.0
    %767 = vmatprep.subr.mxu0 0.0
    %768 = vmatpush1.msra.mxu0 0.0
    %769 = vmatprep.subr.mxu0 0.0
    %770 = vmatpush1.msra.mxu0 0.0
    %771 = vmatprep.subr.mxu0 0.0
    %772 = vmatpush1.msra.mxu0 0.0
    %773 = vmatprep.subr.mxu0 0.0
    %774 = vmatpush1.msra.mxu0 0.0
    %775 = vmatprep.subr.mxu0 0.0
    %776 = vmatpush1.msra.mxu0 0.0
    %777 = vmatprep.subr.mxu0 0.0
    %778 = vmatpush1.msra.mxu0 0.0
    %779 = vmatprep.subr.mxu0 0.0
    %780 = vmatpush1.msra.mxu0 0.0
    %781 = vmatprep.subr.mxu0 0.0
    %782 = vmatpush1.msra.mxu0 0.0
    %783 = vmatprep.subr.mxu0 0.0
    %784 = vmatpush1.msra.mxu0 0.0
    %785 = vmatprep.subr.mxu0 0.0
    %786 = vmatpush1.msra.mxu0 0.0
    %787 = vmatprep.subr.mxu0 0.0
    %788 = vmatpush1.msra.mxu0 0.0
    %789 = vmatprep.subr.mxu0 0.0
    %790 = vmatpush1.msra.mxu0 0.0
    %791 = vmatprep.subr.mxu0 0.0
    %792 = vmatpush1.msra.mxu0 0.0
    %793 = vmatprep.mubr.f32.mxu0 0.0
    %794 = vmatmul.mubr.f32.gmra.mrb[0].mxu0 %v727
    %v795 = vpop.f32.mrb[0].mxu0
    %v796 = vadd.f32 0.0, %v795
    %v797 = vpop.f32.mrb[0].mxu0
    %798 = vdwg.mxu0
    %v799 = vadd.f32 %v176, %v796
    %v800 = vtanh.pop %v799
    %v801 = vxor.u32 %v799, 2147483648
    %v802 = vmul.f32 %v801, 1.442695
    %v803 = vpow.pop %v802
    %v804 = vadd.f32 %v803, 1.0
    %v805 = vrcp.pop %v804
    %v806 = vmul.f32 1.0, %v805
    %v807 = vsel %vm192, %v800, %v806
    %v808 = vmul.f32 %v807, %v717
    %810 = vrot.lane.b32.xlu0 %v807, 64
    %v811 = vpop.permute.xlu0 %810
    %v813 = vmul.f32 %v807, %v811
    %815 = vrot.lane.b32.xlu0 %v813, 32
    %v816 = vpop.permute.xlu0 %815
    %v818 = vadd.f32 %v808, %v816
    %v819 = vtanh.pop %v818
    %821 = vrot.lane.b32.xlu0 %v819, 64
    %v822 = vpop.permute.xlu0 %821
    %v824 = vmul.f32 %v807, %v822
    %826 = vrot.lane.b32.xlu0 %v824, 32
    %v827 = vpop.permute.xlu0 %826
    %v828 = vsel %vm221, %v827, 0
    %830 = vmatprep.subr.mxu0 0.0
    %831 = vmatpush1.msra.mxu0 %v184
    %832 = vmatprep.subr.mxu0 0.0
    %833 = vmatpush1.msra.mxu0 %v185
    %834 = vmatprep.subr.mxu0 0.0
    %835 = vmatpush1.msra.mxu0 %v186
    %836 = vmatprep.subr.mxu0 0.0
    %837 = vmatpush1.msra.mxu0 %v187
    %838 = vmatprep.subr.mxu0 0.0
    %839 = vmatpush1.msra.mxu0 0.0
    %840 = vmatprep.subr.mxu0 0.0
    %841 = vmatpush1.msra.mxu0 0.0
    %842 = vmatprep.subr.mxu0 0.0
    %843 = vmatpush1.msra.mxu0 0.0
    %844 = vmatprep.subr.mxu0 0.0
    %845 = vmatpush1.msra.mxu0 0.0
    %846 = vmatprep.subr.mxu0 0.0
    %847 = vmatpush1.msra.mxu0 0.0
    %848 = vmatprep.subr.mxu0 0.0
    %849 = vmatpush1.msra.mxu0 0.0
    %850 = vmatprep.subr.mxu0 0.0
    %851 = vmatpush1.msra.mxu0 0.0
    %852 = vmatprep.subr.mxu0 0.0
    %853 = vmatpush1.msra.mxu0 0.0
    %854 = vmatprep.subr.mxu0 0.0
    %855 = vmatpush1.msra.mxu0 0.0
    %856 = vmatprep.subr.mxu0 0.0
    %857 = vmatpush1.msra.mxu0 0.0
    %858 = vmatprep.subr.mxu0 0.0
    %859 = vmatpush1.msra.mxu0 0.0
    %860 = vmatprep.subr.mxu0 0.0
    %861 = vmatpush1.msra.mxu0 0.0
    %862 = vmatprep.subr.mxu0 0.0
    %863 = vmatpush1.msra.mxu0 0.0
    %864 = vmatprep.subr.mxu0 0.0
    %865 = vmatpush1.msra.mxu0 0.0
    %866 = vmatprep.subr.mxu0 0.0
    %867 = vmatpush1.msra.mxu0 0.0
    %868 = vmatprep.subr.mxu0 0.0
    %869 = vmatpush1.msra.mxu0 0.0
    %870 = vmatprep.subr.mxu0 0.0
    %871 = vmatpush1.msra.mxu0 0.0
    %872 = vmatprep.subr.mxu0 0.0
    %873 = vmatpush1.msra.mxu0 0.0
    %874 = vmatprep.subr.mxu0 0.0
    %875 = vmatpush1.msra.mxu0 0.0
    %876 = vmatprep.subr.mxu0 0.0
    %877 = vmatpush1.msra.mxu0 0.0
    %878 = vmatprep.subr.mxu0 0.0
    %879 = vmatpush1.msra.mxu0 0.0
    %880 = vmatprep.subr.mxu0 0.0
    %881 = vmatpush1.msra.mxu0 0.0
    %882 = vmatprep.subr.mxu0 0.0
    %883 = vmatpush1.msra.mxu0 0.0
    %884 = vmatprep.subr.mxu0 0.0
    %885 = vmatpush1.msra.mxu0 0.0
    %886 = vmatprep.subr.mxu0 0.0
    %887 = vmatpush1.msra.mxu0 0.0
    %888 = vmatprep.subr.mxu0 0.0
    %889 = vmatpush1.msra.mxu0 0.0
    %890 = vmatprep.subr.mxu0 0.0
    %891 = vmatpush1.msra.mxu0 0.0
    %892 = vmatprep.subr.mxu0 0.0
    %893 = vmatpush1.msra.mxu0 0.0
    %894 = vmatprep.mubr.f32.mxu0 0.0
    %895 = vmatmul.mubr.f32.gmra.mrb[0].mxu0 %v828
    %v896 = vpop.f32.mrb[0].mxu0
    %v897 = vadd.f32 0.0, %v896
    %v898 = vpop.f32.mrb[0].mxu0
    %899 = vdwg.mxu0
    %v900 = vadd.f32 %v181, %v897
    %v901 = vtanh.pop %v900
    %v902 = vxor.u32 %v900, 2147483648
    %v903 = vmul.f32 %v902, 1.442695
    %v904 = vpow.pop %v903
    %v905 = vadd.f32 %v904, 1.0
    %v906 = vrcp.pop %v905
    %v907 = vmul.f32 1.0, %v906
    %v908 = vsel %vm192, %v901, %v907
    %v909 = vmul.f32 %v908, %v818
    %911 = vrot.lane.b32.xlu0 %v908, 64
    %v912 = vpop.permute.xlu0 %911
    %v914 = vmul.f32 %v908, %v912
    %916 = vrot.lane.b32.xlu0 %v914, 32
    %v917 = vpop.permute.xlu0 %916
    %v919 = vadd.f32 %v909, %v917
    %v920 = vtanh.pop %v919
    %922 = vrot.lane.b32.xlu0 %v920, 64
    %v923 = vpop.permute.xlu0 %922
    %v925 = vmul.f32 %v908, %v923
    %v926 = vlaneseq
    %v927 = vshrl.u32 %v926, 7
    %v928 = vld [vmem:[%s5] sm:$0x1]
    %v930 = vlaneseq
    %v931 = vshrl.u32 %v930, 7
    %v932 = vsub.s32 0, %v931
    %v933 = vrot.slane %v928, %v932
    %v935 = vadd.f32 %v933, 0.0
    %v936 = vmul.u32 %v927, 4
    %vm937 = vcmp.eq.s32.totalorder %v189, %v936
    %v938 = vsel %vm937, 1.0, 0.0
    %940 = vrot.lane.b32.xlu0 %v925, 32
    %v941 = vpop.permute.xlu0 %940
    %v944 = vsel %vm54, %v938, 0
    %946 = vmatprep.subr.mxu0 0.0
    %947 = vmatpush1.msra.mxu0 %v941
    %948 = vmatprep.subr.mxu0 0.0
    %949 = vmatpush1.msra.mxu0 0.0
    %950 = vmatprep.subr.mxu0 0.0
    %951 = vmatpush1.msra.mxu0 0.0
    %952 = vmatprep.subr.mxu0 0.0
    %953 = vmatpush1.msra.mxu0 0.0
    %954 = vmatprep.subr.mxu0 0.0
    %955 = vmatpush1.msra.mxu0 0.0
    %956 = vmatprep.subr.mxu0 0.0
    %957 = vmatpush1.msra.mxu0 0.0
    %958 = vmatprep.subr.mxu0 0.0
    %959 = vmatpush1.msra.mxu0 0.0
    %960 = vmatprep.subr.mxu0 0.0
    %961 = vmatpush1.msra.mxu0 0.0
    %962 = vmatprep.subr.mxu0 0.0
    %963 = vmatpush1.msra.mxu0 0.0
    %964 = vmatprep.subr.mxu0 0.0
    %965 = vmatpush1.msra.mxu0 0.0
    %966 = vmatprep.subr.mxu0 0.0
    %967 = vmatpush1.msra.mxu0 0.0
    %968 = vmatprep.subr.mxu0 0.0
    %969 = vmatpush1.msra.mxu0 0.0
    %970 = vmatprep.subr.mxu0 0.0
    %971 = vmatpush1.msra.mxu0 0.0
    %972 = vmatprep.subr.mxu0 0.0
    %973 = vmatpush1.msra.mxu0 0.0
    %974 = vmatprep.subr.mxu0 0.0
    %975 = vmatpush1.msra.mxu0 0.0
    %976 = vmatprep.subr.mxu0 0.0
    %977 = vmatpush1.msra.mxu0 0.0
    %978 = vmatprep.subr.mxu0 0.0
    %979 = vmatpush1.msra.mxu0 0.0
    %980 = vmatprep.subr.mxu0 0.0
    %981 = vmatpush1.msra.mxu0 0.0
    %982 = vmatprep.subr.mxu0 0.0
    %983 = vmatpush1.msra.mxu0 0.0
    %984 = vmatprep.subr.mxu0 0.0
    %985 = vmatpush1.msra.mxu0 0.0
    %986 = vmatprep.subr.mxu0 0.0
    %987 = vmatpush1.msra.mxu0 0.0
    %988 = vmatprep.subr.mxu0 0.0
    %989 = vmatpush1.msra.mxu0 0.0
    %990 = vmatprep.subr.mxu0 0.0
    %991 = vmatpush1.msra.mxu0 0.0
    %992 = vmatprep.subr.mxu0 0.0
    %993 = vmatpush1.msra.mxu0 0.0
    %994 = vmatprep.subr.mxu0 0.0
    %995 = vmatpush1.msra.mxu0 0.0
    %996 = vmatprep.subr.mxu0 0.0
    %997 = vmatpush1.msra.mxu0 0.0
    %998 = vmatprep.subr.mxu0 0.0
    %999 = vmatpush1.msra.mxu0 0.0
    %1000 = vmatprep.subr.mxu0 0.0
    %1001 = vmatpush1.msra.mxu0 0.0
    %1002 = vmatprep.subr.mxu0 0.0
    %1003 = vmatpush1.msra.mxu0 0.0
    %1004 = vmatprep.subr.mxu0 0.0
    %1005 = vmatpush1.msra.mxu0 0.0
    %1006 = vmatprep.subr.mxu0 0.0
    %1007 = vmatpush1.msra.mxu0 0.0
    %1008 = vmatprep.subr.mxu0 0.0
    %1009 = vmatpush1.msra.mxu0 0.0
    %1010 = vmatprep.mubr.f32.mxu0 0.0
    %1011 = vmatmul.mubr.f32.gmra.mrb[0].mxu0 %v944
    %v1012 = vpop.f32.mrb[0].mxu0
    %v1013 = vadd.f32 0.0, %v1012
    %v1014 = vpop.f32.mrb[0].mxu0
    %1015 = vdwg.mxu0
    %v1016 = vld [vmem:[%s4] sm:$0xff]
    %v1017 = vld [vmem:[%s4 + $0x8] sm:$0xff]
    %v1018 = vld [vmem:[%s4 + $0x10] sm:$0xff]
    %v1019 = vld [vmem:[%s4 + $0x18] sm:$0xff]
    %v1021 = vsel %vm221, %v1013, 0
    %1023 = vmatprep.subr.mxu0 0.0
    %1024 = vmatpush1.msra.mxu0 %v1016
    %1025 = vmatprep.subr.mxu0 0.0
    %1026 = vmatpush1.msra.mxu0 %v1017
    %1027 = vmatprep.subr.mxu0 0.0
    %1028 = vmatpush1.msra.mxu0 %v1018
    %1029 = vmatprep.subr.mxu0 0.0
    %1030 = vmatpush1.msra.mxu0 %v1019
    %1031 = vmatprep.subr.mxu0 0.0
    %1032 = vmatpush1.msra.mxu0 0.0
    %1033 = vmatprep.subr.mxu0 0.0
    %1034 = vmatpush1.msra.mxu0 0.0
    %1035 = vmatprep.subr.mxu0 0.0
    %1036 = vmatpush1.msra.mxu0 0.0
    %1037 = vmatprep.subr.mxu0 0.0
    %1038 = vmatpush1.msra.mxu0 0.0
    %1039 = vmatprep.subr.mxu0 0.0
    %1040 = vmatpush1.msra.mxu0 0.0
    %1041 = vmatprep.subr.mxu0 0.0
    %1042 = vmatpush1.msra.mxu0 0.0
    %1043 = vmatprep.subr.mxu0 0.0
    %1044 = vmatpush1.msra.mxu0 0.0
    %1045 = vmatprep.subr.mxu0 0.0
    %1046 = vmatpush1.msra.mxu0 0.0
    %1047 = vmatprep.subr.mxu0 0.0
    %1048 = vmatpush1.msra.mxu0 0.0
    %1049 = vmatprep.subr.mxu0 0.0
    %1050 = vmatpush1.msra.mxu0 0.0
    %1051 = vmatprep.subr.mxu0 0.0
    %1052 = vmatpush1.msra.mxu0 0.0
    %1053 = vmatprep.subr.mxu0 0.0
    %1054 = vmatpush1.msra.mxu0 0.0
    %1055 = vmatprep.subr.mxu0 0.0
    %1056 = vmatpush1.msra.mxu0 0.0
    %1057 = vmatprep.subr.mxu0 0.0
    %1058 = vmatpush1.msra.mxu0 0.0
    %1059 = vmatprep.subr.mxu0 0.0
    %1060 = vmatpush1.msra.mxu0 0.0
    %1061 = vmatprep.subr.mxu0 0.0
    %1062 = vmatpush1.msra.mxu0 0.0
    %1063 = vmatprep.subr.mxu0 0.0
    %1064 = vmatpush1.msra.mxu0 0.0
    %1065 = vmatprep.subr.mxu0 0.0
    %1066 = vmatpush1.msra.mxu0 0.0
    %1067 = vmatprep.subr.mxu0 0.0
    %1068 = vmatpush1.msra.mxu0 0.0
    %1069 = vmatprep.subr.mxu0 0.0
    %1070 = vmatpush1.msra.mxu0 0.0
    %1071 = vmatprep.subr.mxu0 0.0
    %1072 = vmatpush1.msra.mxu0 0.0
    %1073 = vmatprep.subr.mxu0 0.0
    %1074 = vmatpush1.msra.mxu0 0.0
    %1075 = vmatprep.subr.mxu0 0.0
    %1076 = vmatpush1.msra.mxu0 0.0
    %1077 = vmatprep.subr.mxu0 0.0
    %1078 = vmatpush1.msra.mxu0 0.0
    %1079 = vmatprep.subr.mxu0 0.0
    %1080 = vmatpush1.msra.mxu0 0.0
    %1081 = vmatprep.subr.mxu0 0.0
    %1082 = vmatpush1.msra.mxu0 0.0
    %1083 = vmatprep.subr.mxu0 0.0
    %1084 = vmatpush1.msra.mxu0 0.0
    %1085 = vmatprep.subr.mxu0 0.0
    %1086 = vmatpush1.msra.mxu0 0.0
    %1087 = vmatprep.mubr.f32.mxu0 0.0
    %1088 = vmatmul.mubr.f32.gmra.mrb[0].mxu0 %v1021
    %v1089 = vpop.f32.mrb[0].mxu0
    %v1090 = vadd.f32 0.0, %v1089
    %v1091 = vpop.f32.mrb[0].mxu0
    %1092 = vdwg.mxu0
    %v1093 = vadd.f32 %v935, %v1090
    %v1094 = vadd.s32 %v936, 1
    %vm1095 = vcmp.eq.s32.totalorder %v189, %v1094
    %v1096 = vsel %vm1095, 1.0, 0.0
    %v1098 = vsel %vm54, %v1096, 0
    %1100 = vmatprep.subr.mxu0 0.0
    %1101 = vmatpush1.msra.mxu0 %v941
    %1102 = vmatprep.subr.mxu0 0.0
    %1103 = vmatpush1.msra.mxu0 0.0
    %1104 = vmatprep.subr.mxu0 0.0
    %1105 = vmatpush1.msra.mxu0 0.0
    %1106 = vmatprep.subr.mxu0 0.0
    %1107 = vmatpush1.msra.mxu0 0.0
    %1108 = vmatprep.subr.mxu0 0.0
    %1109 = vmatpush1.msra.mxu0 0.0
    %1110 = vmatprep.subr.mxu0 0.0
    %1111 = vmatpush1.msra.mxu0 0.0
    %1112 = vmatprep.subr.mxu0 0.0
    %1113 = vmatpush1.msra.mxu0 0.0
    %1114 = vmatprep.subr.mxu0 0.0
    %1115 = vmatpush1.msra.mxu0 0.0
    %1116 = vmatprep.subr.mxu0 0.0
    %1117 = vmatpush1.msra.mxu0 0.0
    %1118 = vmatprep.subr.mxu0 0.0
    %1119 = vmatpush1.msra.mxu0 0.0
    %1120 = vmatprep.subr.mxu0 0.0
    %1121 = vmatpush1.msra.mxu0 0.0
    %1122 = vmatprep.subr.mxu0 0.0
    %1123 = vmatpush1.msra.mxu0 0.0
    %1124 = vmatprep.subr.mxu0 0.0
    %1125 = vmatpush1.msra.mxu0 0.0
    %1126 = vmatprep.subr.mxu0 0.0
    %1127 = vmatpush1.msra.mxu0 0.0
    %1128 = vmatprep.subr.mxu0 0.0
    %1129 = vmatpush1.msra.mxu0 0.0
    %1130 = vmatprep.subr.mxu0 0.0
    %1131 = vmatpush1.msra.mxu0 0.0
    %1132 = vmatprep.subr.mxu0 0.0
    %1133 = vmatpush1.msra.mxu0 0.0
    %1134 = vmatprep.subr.mxu0 0.0
    %1135 = vmatpush1.msra.mxu0 0.0
    %1136 = vmatprep.subr.mxu0 0.0
    %1137 = vmatpush1.msra.mxu0 0.0
    %1138 = vmatprep.subr.mxu0 0.0
    %1139 = vmatpush1.msra.mxu0 0.0
    %1140 = vmatprep.subr.mxu0 0.0
    %1141 = vmatpush1.msra.mxu0 0.0
    %1142 = vmatprep.subr.mxu0 0.0
    %1143 = vmatpush1.msra.mxu0 0.0
    %1144 = vmatprep.subr.mxu0 0.0
    %1145 = vmatpush1.msra.mxu0 0.0
    %1146 = vmatprep.subr.mxu0 0.0
    %1147 = vmatpush1.msra.mxu0 0.0
    %1148 = vmatprep.subr.mxu0 0.0
    %1149 = vmatpush1.msra.mxu0 0.0
    %1150 = vmatprep.subr.mxu0 0.0
    %1151 = vmatpush1.msra.mxu0 0.0
    %1152 = vmatprep.subr.mxu0 0.0
    %1153 = vmatpush1.msra.mxu0 0.0
    %1154 = vmatprep.subr.mxu0 0.0
    %1155 = vmatpush1.msra.mxu0 0.0
    %1156 = vmatprep.subr.mxu0 0.0
    %1157 = vmatpush1.msra.mxu0 0.0
    %1158 = vmatprep.subr.mxu0 0.0
    %1159 = vmatpush1.msra.mxu0 0.0
    %1160 = vmatprep.subr.mxu0 0.0
    %1161 = vmatpush1.msra.mxu0 0.0
    %1162 = vmatprep.subr.mxu0 0.0
    %1163 = vmatpush1.msra.mxu0 0.0
    %1164 = vmatprep.mubr.f32.mxu0 0.0
    %1165 = vmatmul.mubr.f32.gmra.mrb[0].mxu0 %v1098
    %v1166 = vpop.f32.mrb[0].mxu0
    %v1167 = vadd.f32 0.0, %v1166
    %v1168 = vpop.f32.mrb[0].mxu0
    %1169 = vdwg.mxu0
    %v1170 = vld [vmem:[%s4 + $0x20] sm:$0xff]
    %v1171 = vld [vmem:[%s4 + $0x28] sm:$0xff]
    %v1172 = vld [vmem:[%s4 + $0x30] sm:$0xff]
    %v1173 = vld [vmem:[%s4 + $0x38] sm:$0xff]
    %v1175 = vsel %vm221, %v1167, 0
    %1177 = vmatprep.subr.mxu0 0.0
    %1178 = vmatpush1.msra.mxu0 %v1170
    %1179 = vmatprep.subr.mxu0 0.0
    %1180 = vmatpush1.msra.mxu0 %v1171
    %1181 = vmatprep.subr.mxu0 0.0
    %1182 = vmatpush1.msra.mxu0 %v1172
    %1183 = vmatprep.subr.mxu0 0.0
    %1184 = vmatpush1.msra.mxu0 %v1173
    %1185 = vmatprep.subr.mxu0 0.0
    %1186 = vmatpush1.msra.mxu0 0.0
    %1187 = vmatprep.subr.mxu0 0.0
    %1188 = vmatpush1.msra.mxu0 0.0
    %1189 = vmatprep.subr.mxu0 0.0
    %1190 = vmatpush1.msra.mxu0 0.0
    %1191 = vmatprep.subr.mxu0 0.0
    %1192 = vmatpush1.msra.mxu0 0.0
    %1193 = vmatprep.subr.mxu0 0.0
    %1194 = vmatpush1.msra.mxu0 0.0
    %1195 = vmatprep.subr.mxu0 0.0
    %1196 = vmatpush1.msra.mxu0 0.0
    %1197 = vmatprep.subr.mxu0 0.0
    %1198 = vmatpush1.msra.mxu0 0.0
    %1199 = vmatprep.subr.mxu0 0.0
    %1200 = vmatpush1.msra.mxu0 0.0
    %1201 = vmatprep.subr.mxu0 0.0
    %1202 = vmatpush1.msra.mxu0 0.0
    %1203 = vmatprep.subr.mxu0 0.0
    %1204 = vmatpush1.msra.mxu0 0.0
    %1205 = vmatprep.subr.mxu0 0.0
    %1206 = vmatpush1.msra.mxu0 0.0
    %1207 = vmatprep.subr.mxu0 0.0
    %1208 = vmatpush1.msra.mxu0 0.0
    %1209 = vmatprep.subr.mxu0 0.0
    %1210 = vmatpush1.msra.mxu0 0.0
    %1211 = vmatprep.subr.mxu0 0.0
    %1212 = vmatpush1.msra.mxu0 0.0
    %1213 = vmatprep.subr.mxu0 0.0
    %1214 = vmatpush1.msra.mxu0 0.0
    %1215 = vmatprep.subr.mxu0 0.0
    %1216 = vmatpush1.msra.mxu0 0.0
    %1217 = vmatprep.subr.mxu0 0.0
    %1218 = vmatpush1.msra.mxu0 0.0
    %1219 = vmatprep.subr.mxu0 0.0
    %1220 = vmatpush1.msra.mxu0 0.0
    %1221 = vmatprep.subr.mxu0 0.0
    %1222 = vmatpush1.msra.mxu0 0.0
    %1223 = vmatprep.subr.mxu0 0.0
    %1224 = vmatpush1.msra.mxu0 0.0
    %1225 = vmatprep.subr.mxu0 0.0
    %1226 = vmatpush1.msra.mxu0 0.0
    %1227 = vmatprep.subr.mxu0 0.0
    %1228 = vmatpush1.msra.mxu0 0.0
    %1229 = vmatprep.subr.mxu0 0.0
    %1230 = vmatpush1.msra.mxu0 0.0
    %1231 = vmatprep.subr.mxu0 0.0
    %1232 = vmatpush1.msra.mxu0 0.0
    %1233 = vmatprep.subr.mxu0 0.0
    %1234 = vmatpush1.msra.mxu0 0.0
    %1235 = vmatprep.subr.mxu0 0.0
    %1236 = vmatpush1.msra.mxu0 0.0
    %1237 = vmatprep.subr.mxu0 0.0
    %1238 = vmatpush1.msra.mxu0 0.0
    %1239 = vmatprep.subr.mxu0 0.0
    %1240 = vmatpush1.msra.mxu0 0.0
    %1241 = vmatprep.mubr.f32.mxu0 0.0
    %1242 = vmatmul.mubr.f32.gmra.mrb[0].mxu0 %v1175
    %v1243 = vpop.f32.mrb[0].mxu0
    %v1244 = vadd.f32 0.0, %v1243
    %v1245 = vpop.f32.mrb[0].mxu0
    %1246 = vdwg.mxu0
    %v1247 = vadd.f32 %v1093, %v1244
    %v1248 = vadd.s32 %v936, 2
    %vm1249 = vcmp.eq.s32.totalorder %v189, %v1248
    %v1250 = vsel %vm1249, 1.0, 0.0
    %v1252 = vsel %vm54, %v1250, 0
    %1254 = vmatprep.subr.mxu0 0.0
    %1255 = vmatpush1.msra.mxu0 %v941
    %1256 = vmatprep.subr.mxu0 0.0
    %1257 = vmatpush1.msra.mxu0 0.0
    %1258 = vmatprep.subr.mxu0 0.0
    %1259 = vmatpush1.msra.mxu0 0.0
    %1260 = vmatprep.subr.mxu0 0.0
    %1261 = vmatpush1.msra.mxu0 0.0
    %1262 = vmatprep.subr.mxu0 0.0
    %1263 = vmatpush1.msra.mxu0 0.0
    %1264 = vmatprep.subr.mxu0 0.0
    %1265 = vmatpush1.msra.mxu0 0.0
    %1266 = vmatprep.subr.mxu0 0.0
    %1267 = vmatpush1.msra.mxu0 0.0
    %1268 = vmatprep.subr.mxu0 0.0
    %1269 = vmatpush1.msra.mxu0 0.0
    %1270 = vmatprep.subr.mxu0 0.0
    %1271 = vmatpush1.msra.mxu0 0.0
    %1272 = vmatprep.subr.mxu0 0.0
    %1273 = vmatpush1.msra.mxu0 0.0
    %1274 = vmatprep.subr.mxu0 0.0
    %1275 = vmatpush1.msra.mxu0 0.0
    %1276 = vmatprep.subr.mxu0 0.0
    %1277 = vmatpush1.msra.mxu0 0.0
    %1278 = vmatprep.subr.mxu0 0.0
    %1279 = vmatpush1.msra.mxu0 0.0
    %1280 = vmatprep.subr.mxu0 0.0
    %1281 = vmatpush1.msra.mxu0 0.0
    %1282 = vmatprep.subr.mxu0 0.0
    %1283 = vmatpush1.msra.mxu0 0.0
    %1284 = vmatprep.subr.mxu0 0.0
    %1285 = vmatpush1.msra.mxu0 0.0
    %1286 = vmatprep.subr.mxu0 0.0
    %1287 = vmatpush1.msra.mxu0 0.0
    %1288 = vmatprep.subr.mxu0 0.0
    %1289 = vmatpush1.msra.mxu0 0.0
    %1290 = vmatprep.subr.mxu0 0.0
    %1291 = vmatpush1.msra.mxu0 0.0
    %1292 = vmatprep.subr.mxu0 0.0
    %1293 = vmatpush1.msra.mxu0 0.0
    %1294 = vmatprep.subr.mxu0 0.0
    %1295 = vmatpush1.msra.mxu0 0.0
    %1296 = vmatprep.subr.mxu0 0.0
    %1297 = vmatpush1.msra.mxu0 0.0
    %1298 = vmatprep.subr.mxu0 0.0
    %1299 = vmatpush1.msra.mxu0 0.0
    %1300 = vmatprep.subr.mxu0 0.0
    %1301 = vmatpush1.msra.mxu0 0.0
    %1302 = vmatprep.subr.mxu0 0.0
    %1303 = vmatpush1.msra.mxu0 0.0
    %1304 = vmatprep.subr.mxu0 0.0
    %1305 = vmatpush1.msra.mxu0 0.0
    %1306 = vmatprep.subr.mxu0 0.0
    %1307 = vmatpush1.msra.mxu0 0.0
    %1308 = vmatprep.subr.mxu0 0.0
    %1309 = vmatpush1.msra.mxu0 0.0
    %1310 = vmatprep.subr.mxu0 0.0
    %1311 = vmatpush1.msra.mxu0 0.0
    %1312 = vmatprep.subr.mxu0 0.0
    %1313 = vmatpush1.msra.mxu0 0.0
    %1314 = vmatprep.subr.mxu0 0.0
    %1315 = vmatpush1.msra.mxu0 0.0
    %1316 = vmatprep.subr.mxu0 0.0
    %1317 = vmatpush1.msra.mxu0 0.0
    %1318 = vmatprep.mubr.f32.mxu0 0.0
    %1319 = vmatmul.mubr.f32.gmra.mrb[0].mxu0 %v1252
    %v1320 = vpop.f32.mrb[0].mxu0
    %v1321 = vadd.f32 0.0, %v1320
    %v1322 = vpop.f32.mrb[0].mxu0
    %1323 = vdwg.mxu0
    %v1324 = vld [vmem:[%s4 + $0x40] sm:$0xff]
    %v1325 = vld [vmem:[%s4 + $0x48] sm:$0xff]
    %v1326 = vld [vmem:[%s4 + $0x50] sm:$0xff]
    %v1327 = vld [vmem:[%s4 + $0x58] sm:$0xff]
    %v1329 = vsel %vm221, %v1321, 0
    %1331 = vmatprep.subr.mxu0 0.0
    %1332 = vmatpush1.msra.mxu0 %v1324
    %1333 = vmatprep.subr.mxu0 0.0
    %1334 = vmatpush1.msra.mxu0 %v1325
    %1335 = vmatprep.subr.mxu0 0.0
    %1336 = vmatpush1.msra.mxu0 %v1326
    %1337 = vmatprep.subr.mxu0 0.0
    %1338 = vmatpush1.msra.mxu0 %v1327
    %1339 = vmatprep.subr.mxu0 0.0
    %1340 = vmatpush1.msra.mxu0 0.0
    %1341 = vmatprep.subr.mxu0 0.0
    %1342 = vmatpush1.msra.mxu0 0.0
    %1343 = vmatprep.subr.mxu0 0.0
    %1344 = vmatpush1.msra.mxu0 0.0
    %1345 = vmatprep.subr.mxu0 0.0
    %1346 = vmatpush1.msra.mxu0 0.0
    %1347 = vmatprep.subr.mxu0 0.0
    %1348 = vmatpush1.msra.mxu0 0.0
    %1349 = vmatprep.subr.mxu0 0.0
    %1350 = vmatpush1.msra.mxu0 0.0
    %1351 = vmatprep.subr.mxu0 0.0
    %1352 = vmatpush1.msra.mxu0 0.0
    %1353 = vmatprep.subr.mxu0 0.0
    %1354 = vmatpush1.msra.mxu0 0.0
    %1355 = vmatprep.subr.mxu0 0.0
    %1356 = vmatpush1.msra.mxu0 0.0
    %1357 = vmatprep.subr.mxu0 0.0
    %1358 = vmatpush1.msra.mxu0 0.0
    %1359 = vmatprep.subr.mxu0 0.0
    %1360 = vmatpush1.msra.mxu0 0.0
    %1361 = vmatprep.subr.mxu0 0.0
    %1362 = vmatpush1.msra.mxu0 0.0
    %1363 = vmatprep.subr.mxu0 0.0
    %1364 = vmatpush1.msra.mxu0 0.0
    %1365 = vmatprep.subr.mxu0 0.0
    %1366 = vmatpush1.msra.mxu0 0.0
    %1367 = vmatprep.subr.mxu0 0.0
    %1368 = vmatpush1.msra.mxu0 0.0
    %1369 = vmatprep.subr.mxu0 0.0
    %1370 = vmatpush1.msra.mxu0 0.0
    %1371 = vmatprep.subr.mxu0 0.0
    %1372 = vmatpush1.msra.mxu0 0.0
    %1373 = vmatprep.subr.mxu0 0.0
    %1374 = vmatpush1.msra.mxu0 0.0
    %1375 = vmatprep.subr.mxu0 0.0
    %1376 = vmatpush1.msra.mxu0 0.0
    %1377 = vmatprep.subr.mxu0 0.0
    %1378 = vmatpush1.msra.mxu0 0.0
    %1379 = vmatprep.subr.mxu0 0.0
    %1380 = vmatpush1.msra.mxu0 0.0
    %1381 = vmatprep.subr.mxu0 0.0
    %1382 = vmatpush1.msra.mxu0 0.0
    %1383 = vmatprep.subr.mxu0 0.0
    %1384 = vmatpush1.msra.mxu0 0.0
    %1385 = vmatprep.subr.mxu0 0.0
    %1386 = vmatpush1.msra.mxu0 0.0
    %1387 = vmatprep.subr.mxu0 0.0
    %1388 = vmatpush1.msra.mxu0 0.0
    %1389 = vmatprep.subr.mxu0 0.0
    %1390 = vmatpush1.msra.mxu0 0.0
    %1391 = vmatprep.subr.mxu0 0.0
    %1392 = vmatpush1.msra.mxu0 0.0
    %1393 = vmatprep.subr.mxu0 0.0
    %1394 = vmatpush1.msra.mxu0 0.0
    %1395 = vmatprep.mubr.f32.mxu0 0.0
    %1396 = vmatmul.mubr.f32.gmra.mrb[0].mxu0 %v1329
    %v1397 = vpop.f32.mrb[0].mxu0
    %v1398 = vadd.f32 0.0, %v1397
    %v1399 = vpop.f32.mrb[0].mxu0
    %1400 = vdwg.mxu0
    %v1401 = vadd.f32 %v1247, %v1398
    %v1402 = vadd.s32 %v936, 3
    %vm1403 = vcmp.eq.s32.totalorder %v189, %v1402
    %v1404 = vsel %vm1403, 1.0, 0.0
    %v1406 = vsel %vm54, %v1404, 0
    %1408 = vmatprep.subr.mxu0 0.0
    %1409 = vmatpush1.msra.mxu0 %v941
    %1410 = vmatprep.subr.mxu0 0.0
    %1411 = vmatpush1.msra.mxu0 0.0
    %1412 = vmatprep.subr.mxu0 0.0
    %1413 = vmatpush1.msra.mxu0 0.0
    %1414 = vmatprep.subr.mxu0 0.0
    %1415 = vmatpush1.msra.mxu0 0.0
    %1416 = vmatprep.subr.mxu0 0.0
    %1417 = vmatpush1.msra.mxu0 0.0
    %1418 = vmatprep.subr.mxu0 0.0
    %1419 = vmatpush1.msra.mxu0 0.0
    %1420 = vmatprep.subr.mxu0 0.0
    %1421 = vmatpush1.msra.mxu0 0.0
    %1422 = vmatprep.subr.mxu0 0.0
    %1423 = vmatpush1.msra.mxu0 0.0
    %1424 = vmatprep.subr.mxu0 0.0
    %1425 = vmatpush1.msra.mxu0 0.0
    %1426 = vmatprep.subr.mxu0 0.0
    %1427 = vmatpush1.msra.mxu0 0.0
    %1428 = vmatprep.subr.mxu0 0.0
    %1429 = vmatpush1.msra.mxu0 0.0
    %1430 = vmatprep.subr.mxu0 0.0
    %1431 = vmatpush1.msra.mxu0 0.0
    %1432 = vmatprep.subr.mxu0 0.0
    %1433 = vmatpush1.msra.mxu0 0.0
    %1434 = vmatprep.subr.mxu0 0.0
    %1435 = vmatpush1.msra.mxu0 0.0
    %1436 = vmatprep.subr.mxu0 0.0
    %1437 = vmatpush1.msra.mxu0 0.0
    %1438 = vmatprep.subr.mxu0 0.0
    %1439 = vmatpush1.msra.mxu0 0.0
    %1440 = vmatprep.subr.mxu0 0.0
    %1441 = vmatpush1.msra.mxu0 0.0
    %1442 = vmatprep.subr.mxu0 0.0
    %1443 = vmatpush1.msra.mxu0 0.0
    %1444 = vmatprep.subr.mxu0 0.0
    %1445 = vmatpush1.msra.mxu0 0.0
    %1446 = vmatprep.subr.mxu0 0.0
    %1447 = vmatpush1.msra.mxu0 0.0
    %1448 = vmatprep.subr.mxu0 0.0
    %1449 = vmatpush1.msra.mxu0 0.0
    %1450 = vmatprep.subr.mxu0 0.0
    %1451 = vmatpush1.msra.mxu0 0.0
    %1452 = vmatprep.subr.mxu0 0.0
    %1453 = vmatpush1.msra.mxu0 0.0
    %1454 = vmatprep.subr.mxu0 0.0
    %1455 = vmatpush1.msra.mxu0 0.0
    %1456 = vmatprep.subr.mxu0 0.0
    %1457 = vmatpush1.msra.mxu0 0.0
    %1458 = vmatprep.subr.mxu0 0.0
    %1459 = vmatpush1.msra.mxu0 0.0
    %1460 = vmatprep.subr.mxu0 0.0
    %1461 = vmatpush1.msra.mxu0 0.0
    %1462 = vmatprep.subr.mxu0 0.0
    %1463 = vmatpush1.msra.mxu0 0.0
    %1464 = vmatprep.subr.mxu0 0.0
    %1465 = vmatpush1.msra.mxu0 0.0
    %1466 = vmatprep.subr.mxu0 0.0
    %1467 = vmatpush1.msra.mxu0 0.0
    %1468 = vmatprep.subr.mxu0 0.0
    %1469 = vmatpush1.msra.mxu0 0.0
    %1470 = vmatprep.subr.mxu0 0.0
    %1471 = vmatpush1.msra.mxu0 0.0
    %1472 = vmatprep.mubr.f32.mxu0 0.0
    %1473 = vmatmul.mubr.f32.gmra.mrb[0].mxu0 %v1406
    %v1474 = vpop.f32.mrb[0].mxu0
    %v1475 = vadd.f32 0.0, %v1474
    %v1476 = vpop.f32.mrb[0].mxu0
    %1477 = vdwg.mxu0
    %v1478 = vld [vmem:[%s4 + $0x60] sm:$0xff]
    %v1479 = vld [vmem:[%s4 + $0x68] sm:$0xff]
    %v1480 = vld [vmem:[%s4 + $0x70] sm:$0xff]
    %v1481 = vld [vmem:[%s4 + $0x78] sm:$0xff]
    %v1483 = vsel %vm221, %v1475, 0
    %1485 = vmatprep.subr.mxu0 0.0
    %1486 = vmatpush1.msra.mxu0 %v1478
    %1487 = vmatprep.subr.mxu0 0.0
    %1488 = vmatpush1.msra.mxu0 %v1479
    %1489 = vmatprep.subr.mxu0 0.0
    %1490 = vmatpush1.msra.mxu0 %v1480
    %1491 = vmatprep.subr.mxu0 0.0
    %1492 = vmatpush1.msra.mxu0 %v1481
    %1493 = vmatprep.subr.mxu0 0.0
    %1494 = vmatpush1.msra.mxu0 0.0
    %1495 = vmatprep.subr.mxu0 0.0
    %1496 = vmatpush1.msra.mxu0 0.0
    %1497 = vmatprep.subr.mxu0 0.0
    %1498 = vmatpush1.msra.mxu0 0.0
    %1499 = vmatprep.subr.mxu0 0.0
    %1500 = vmatpush1.msra.mxu0 0.0
    %1501 = vmatprep.subr.mxu0 0.0
    %1502 = vmatpush1.msra.mxu0 0.0
    %1503 = vmatprep.subr.mxu0 0.0
    %1504 = vmatpush1.msra.mxu0 0.0
    %1505 = vmatprep.subr.mxu0 0.0
    %1506 = vmatpush1.msra.mxu0 0.0
    %1507 = vmatprep.subr.mxu0 0.0
    %1508 = vmatpush1.msra.mxu0 0.0
    %1509 = vmatprep.subr.mxu0 0.0
    %1510 = vmatpush1.msra.mxu0 0.0
    %1511 = vmatprep.subr.mxu0 0.0
    %1512 = vmatpush1.msra.mxu0 0.0
    %1513 = vmatprep.subr.mxu0 0.0
    %1514 = vmatpush1.msra.mxu0 0.0
    %1515 = vmatprep.subr.mxu0 0.0
    %1516 = vmatpush1.msra.mxu0 0.0
    %1517 = vmatprep.subr.mxu0 0.0
    %1518 = vmatpush1.msra.mxu0 0.0
    %1519 = vmatprep.subr.mxu0 0.0
    %1520 = vmatpush1.msra.mxu0 0.0
    %1521 = vmatprep.subr.mxu0 0.0
    %1522 = vmatpush1.msra.mxu0 0.0
    %1523 = vmatprep.subr.mxu0 0.0
    %1524 = vmatpush1.msra.mxu0 0.0
    %1525 = vmatprep.subr.mxu0 0.0
    %1526 = vmatpush1.msra.mxu0 0.0
    %1527 = vmatprep.subr.mxu0 0.0
    %1528 = vmatpush1.msra.mxu0 0.0
    %1529 = vmatprep.subr.mxu0 0.0
    %1530 = vmatpush1.msra.mxu0 0.0
    %1531 = vmatprep.subr.mxu0 0.0
    %1532 = vmatpush1.msra.mxu0 0.0
    %1533 = vmatprep.subr.mxu0 0.0
    %1534 = vmatpush1.msra.mxu0 0.0
    %1535 = vmatprep.subr.mxu0 0.0
    %1536 = vmatpush1.msra.mxu0 0.0
    %1537 = vmatprep.subr.mxu0 0.0
    %1538 = vmatpush1.msra.mxu0 0.0
    %1539 = vmatprep.subr.mxu0 0.0
    %1540 = vmatpush1.msra.mxu0 0.0
    %1541 = vmatprep.subr.mxu0 0.0
    %1542 = vmatpush1.msra.mxu0 0.0
    %1543 = vmatprep.subr.mxu0 0.0
    %1544 = vmatpush1.msra.mxu0 0.0
    %1545 = vmatprep.subr.mxu0 0.0
    %1546 = vmatpush1.msra.mxu0 0.0
    %1547 = vmatprep.subr.mxu0 0.0
    %1548 = vmatpush1.msra.mxu0 0.0
    %1549 = vmatprep.mubr.f32.mxu0 0.0
    %1550 = vmatmul.mubr.f32.gmra.mrb[0].mxu0 %v1483
    %v1551 = vpop.f32.mrb[0].mxu0
    %v1552 = vadd.f32 0.0, %v1551
    %v1553 = vpop.f32.mrb[0].mxu0
    %1554 = vdwg.mxu0
    %v1555 = vadd.f32 %v1401, %v1552
    %vm1556 = vcmask 1041408
    %v1557 = vsel %vm1556, %v1555, -inf
    %1558 = vmax.xlane.f32.xlu0 %v1557
    %v1559 = vpop.xlane.xlu0 %1558
    %v1560 = vsub.f32 %v1555, %v1559
    %v1561 = vmul.f32 %v1560, 1.442695
    %v1562 = vpow.pop %v1561
    %v1563 = vsel %vm1556, %v1562, 0.0
    %1564 = vadd.xlane.f32.xlu0 %v1563
    %v1565 = vpop.xlane.xlu0 %1564
    %v1566 = vrcp.pop %v1565
    %v1567 = vmul.f32 %v1562, %v1566
    %1568 = vst [vmem:[#allocation5] sm:$0x3] %v1567
    // Predicated region
    $region30: #{actor_forward.1} parent=1 // pred_check
      _
    $region31: #{actor_forward.1} parent=1 // pred_check_branch
      %1570 = sbr.rel (0) target = $region33
    $region32: #{actor_forward.1} parent=1 // pred_region
      %s1572 = ssub.s32 32, 32
      %1573 = vsyncadd [#allocation4], %s1572
      %s1575 = sshll.u32 [#allocation5], 4
      %s1576 = int_to_ptr.vmem [resolvable:$true] %s1575
      %1578 = dma.vmem_to_hbm [thread:$0]  %s1576, 32, %s6, [#allocation4]
    $region33: #{actor_forward.1} parent=1 // pred_fallthru
      _
    // Predicated region
    $region34: #{actor_forward.1} parent=1 // pred_check
      _
    $region35: #{actor_forward.1} parent=1 // pred_check_branch
      %1580 = sbr.rel (0) target = $region37
    $region36: #{actor_forward.1} parent=1 // pred_region
      %1581 = dma.done [#allocation4], 32
    $region37: #{actor_forward.1} parent=1 // pred_fallthru
      _
    %1582 = vsyncpa [#allocation3], 1
    %1583 = vsyncpa [#allocation4], 1

</llo_original>
